<compile_context>
chip_gen: v5e
topology: v5e:2x2
jax: 0.10.0
libtpu: 0.0.40
codegen_flags: <defaults>
</compile_context>

<pallas_src>
import numpy as np
import jax
import jax.numpy as jnp
from jax import lax
from jax.experimental import pallas as pl
from jax.experimental.pallas import tpu as pltpu

INPUT_SIZE = 3
HIDDEN = 64
NUM_LAYERS = 2
NUM_CLASSES = 4
CPAD = 128  # final-FC output padded to one full lane width


def fatigue_rnn_kernel(add_ref, wcomb_ref, wfc_ref, bfc_ref, out_ref):
    """Skewed, gate-packed 2-layer LSTM recurrence + final FC.

    add_ref  : (T+1, B, 8H) f32   per-step additive term (x-projection + biases)
    wcomb_ref: (2H, 8H)     bf16  fused recurrent weights, packed gate columns
    wfc_ref  : (2H, CPAD)   f32   final FC (rows 0:H zero -> selects h of layer 1)
    bfc_ref  : (1, CPAD)    f32
    out_ref  : (B, CPAD)    f32
    """
    S = add_ref.shape[0]          # T + 1 skewed iterations
    B = add_ref.shape[1]
    H = HIDDEN
    H2 = 2 * H                    # packed state width (layer0 | layer1)

    def sigm(z):                  # sigmoid via EUP tanh (no divide)
        return 0.5 * jnp.tanh(0.5 * z) + 0.5

    def step(s, carry):
        h_pack, c_pack = carry                                   # (B, 2H) f32
        gates = jnp.dot(h_pack.astype(jnp.bfloat16), wcomb_ref[...],
                        preferred_element_type=jnp.float32) + add_ref[s]
        # 128-lane (vreg-aligned) gate blocks: [i | f | g | o], each (B, 2H).
        i_all = sigm(gates[:, 0 * H2:1 * H2])
        f_all = sigm(gates[:, 1 * H2:2 * H2])
        g_all = jnp.tanh(gates[:, 2 * H2:3 * H2])
        o_all = sigm(gates[:, 3 * H2:4 * H2])
        c_new = f_all * c_pack + i_all * g_all
        h_new = o_all * jnp.tanh(c_new)
        return h_new, c_new

    init = (jnp.zeros((B, H2), jnp.float32), jnp.zeros((B, H2), jnp.float32))
    unroll = S if S <= 16 else 4
    h_pack, _ = lax.fori_loop(0, S, step, init, unroll=unroll)

    # h_pack = [h0(T) (discarded), h1(T-1)]; wfc rows 0:H are zero, so the dot
    # selects the layer-1 hidden state without a sub-vreg lane extract.
    out_ref[...] = (jnp.dot(h_pack, wfc_ref[...],
                            preferred_element_type=jnp.float32)
                    + bfc_ref[...]).astype(out_ref.dtype)


def _split_gates(w, H):
    """(4H, K) PyTorch gate-major weight -> (K, 4, H) = [in, gate, out]."""
    return jnp.transpose(w.reshape(4, H, -1), (2, 0, 1))


def fatigue_rnn_forward(x, p):
    """x: (B, T, INPUT_SIZE) float32  ->  logits (B, NUM_CLASSES)."""
    B, T, I = x.shape
    assert I == INPUT_SIZE
    H = HIDDEN
    Bp = ((max(B, 8) + 7) // 8) * 8          # pad batch to a full sublane tile

    x_tm = jnp.transpose(x, (1, 0, 2)).astype(jnp.float32)        # (T, B, I)
    x_tm = jnp.pad(x_tm, ((0, 0), (0, Bp - B), (0, 0)))           # (T, Bp, I)

    b0 = (p["b_ih_l0"] + p["b_hh_l0"]).astype(jnp.float32)        # (4H,)
    b1 = (p["b_ih_l1"] + p["b_hh_l1"]).astype(jnp.float32)        # (4H,)

    # Hoisted layer-0 input projection for all timesteps (one real matmul in XLA).
    xproj = jnp.einsum("tbi,gi->tbg", x_tm,
                       p["w_ih_l0"].astype(jnp.float32)) + b0     # (T, Bp, 4H)

    # Per-iteration additive term for the skewed schedule, packed gate order
    # [i0 i1 f0 f1 g0 g1 o0 o1].  Iteration s drives layer0(t=s) & layer1(t=s-1):
    #   s = 0      : layer0 add = xproj[0], layer1 add = 0   (keeps h1,c1 == 0)
    #   1 .. T-1   : layer0 add = xproj[s], layer1 add = b1
    #   s = T      : layer0 add = 0 (result discarded), layer1 add = b1
    add_l0 = jnp.concatenate(
        [xproj, jnp.zeros((1, Bp, 4 * H), jnp.float32)], axis=0)          # (T+1,Bp,4H)
    add_l1 = jnp.concatenate(
        [jnp.zeros((1, Bp, 4 * H), jnp.float32),
         jnp.broadcast_to(b1, (T, Bp, 4 * H))], axis=0)                   # (T+1,Bp,4H)
    add = jnp.stack([add_l0.reshape(T + 1, Bp, 4, H),
                     add_l1.reshape(T + 1, Bp, 4, H)], axis=3)
    add = add.reshape(T + 1, Bp, 8 * H)                                   # (T+1,Bp,8H)

    # Fused recurrent weight (2H, 8H): rows = [h0 | h1], packed gate columns.
    #   layer-0 gate columns: h0 @ W_hh_l0^T             (h1 rows zero)
    #   layer-1 gate columns: h0 @ W_ih_l1^T + h1 @ W_hh_l1^T
    top = jnp.stack([_split_gates(p["w_hh_l0"].astype(jnp.float32), H),
                     _split_gates(p["w_ih_l1"].astype(jnp.float32), H)], axis=2)
    bot = jnp.stack([jnp.zeros((H, 4, H), jnp.float32),
                     _split_gates(p["w_hh_l1"].astype(jnp.float32), H)], axis=2)
    w_comb = jnp.concatenate([top, bot], axis=0).reshape(2 * H, 8 * H)
    w_comb = w_comb.astype(jnp.bfloat16)     # bf16 MXU operands, f32 accumulate

    # Final FC: rows 0:H zero so the matmul picks out the layer-1 hidden state;
    # output lanes padded to 128 for an unmasked store.
    wfc = jnp.zeros((2 * H, CPAD), jnp.float32).at[H:, :NUM_CLASSES].set(
        p["w_fc"].T.astype(jnp.float32))
    bfc = jnp.zeros((1, CPAD), jnp.float32).at[0, :NUM_CLASSES].set(
        p["b_fc"].astype(jnp.float32))

    vmem = pl.BlockSpec(memory_space=pltpu.MemorySpace.VMEM)
    out = pl.pallas_call(
        fatigue_rnn_kernel,
        out_shape=jax.ShapeDtypeStruct((Bp, CPAD), jnp.float32),
        in_specs=[vmem] * 4,
        out_specs=vmem,
    )(add, w_comb, wfc, bfc)
    # TODO(synk): for very long T, stream `add` over a time-chunk grid
    # (accumulator pattern) and shard batch chunks across TensorCores (v7x);
    # unnecessary at these sizes (everything is <1 MiB of VMEM).
    return out[:B, :NUM_CLASSES]


def init_params(key):
    """Deterministic params matching the PyTorch module's parameter shapes."""
    k = 1.0 / np.sqrt(HIDDEN)
    keys = jax.random.split(key, 10)

    def u(kk, shape):
        return jax.random.uniform(kk, shape, jnp.float32, minval=-k, maxval=k)

    return {
        "w_ih_l0": u(keys[0], (4 * HIDDEN, INPUT_SIZE)),
        "w_hh_l0": u(keys[1], (4 * HIDDEN, HIDDEN)),
        "b_ih_l0": u(keys[2], (4 * HIDDEN,)),
        "b_hh_l0": u(keys[3], (4 * HIDDEN,)),
        "w_ih_l1": u(keys[4], (4 * HIDDEN, HIDDEN)),
        "w_hh_l1": u(keys[5], (4 * HIDDEN, HIDDEN)),
        "b_ih_l1": u(keys[6], (4 * HIDDEN,)),
        "b_hh_l1": u(keys[7], (4 * HIDDEN,)),
        "w_fc": u(keys[8], (NUM_CLASSES, HIDDEN)),
        "b_fc": u(keys[9], (NUM_CLASSES,)),
    }


def reference_forward(x, p):
    """Pure-JAX reference of the PyTorch forward (eval mode)."""
    B, T, _ = x.shape
    H = HIDDEN

    def cell(gates, c_prev):
        i = jax.nn.sigmoid(gates[:, 0 * H:1 * H])
        f = jax.nn.sigmoid(gates[:, 1 * H:2 * H])
        g = jnp.tanh(gates[:, 2 * H:3 * H])
        o = jax.nn.sigmoid(gates[:, 3 * H:4 * H])
        c = f * c_prev + i * g
        return o * jnp.tanh(c), c

    h0 = c0 = h1 = c1 = jnp.zeros((B, H), jnp.float32)
    for t in range(T):
        x_t = x[:, t, :]
        g0 = x_t @ p["w_ih_l0"].T + h0 @ p["w_hh_l0"].T + p["b_ih_l0"] + p["b_hh_l0"]
        h0, c0 = cell(g0, c0)
        g1 = h0 @ p["w_ih_l1"].T + h1 @ p["w_hh_l1"].T + p["b_ih_l1"] + p["b_hh_l1"]
        h1, c1 = cell(g1, c1)
    return h1 @ p["w_fc"].T + p["b_fc"]


if __name__ == "__main__":
    key = jax.random.PRNGKey(0)
    kx, kp = jax.random.split(key)

    B, T = 2, 8
    x = jax.random.normal(kx, (B, T, INPUT_SIZE), jnp.float32)
    params = init_params(kp)

    out = fatigue_rnn_forward(x, params)
    out = jax.block_until_ready(out)

    ref = jax.block_until_ready(reference_forward(x, params))
    assert out.shape == (B, NUM_CLASSES)
    # Tolerance accounts for bf16 matmul operands in the recurrence (f32 accumulate
    # and f32 cell state keep the error well below this).
    np.testing.assert_allclose(np.asarray(out), np.asarray(ref),
                               rtol=2e-2, atol=2e-2)

    print("KERNEL_OK")
</pallas_src>

<mosaic_0001>
module attributes {stable_mosaic.version = 11 : i64} {
  func.func @fatigue_rnn_kernel(%arg0: memref<9x8x512xf32, #tpu.memory_space<vmem>>, %arg1: memref<128x512xbf16, #tpu.memory_space<vmem>>, %arg2: memref<128x128xf32, #tpu.memory_space<vmem>>, %arg3: memref<1x128xf32, #tpu.memory_space<vmem>>, %arg4: memref<8x128xf32, #tpu.memory_space<vmem>>) attributes {dimension_semantics = [], scalar_prefetch = 0 : i64, scratch_operands = 0 : i64, tpu.core_type = #tpu.core_type<tc>} {
    %cst = arith.constant 0.000000e+00 : f32
    %0 = vector.broadcast %cst : f32 to vector<8x128xf32>
    %cst_0 = arith.constant 0.000000e+00 : f32
    %1 = vector.broadcast %cst_0 : f32 to vector<8x128xf32>
    %c0_i32 = arith.constant 0 : i32
    %2 = arith.truncf %0 : vector<8x128xf32> to vector<8x128xbf16>
    %c0 = arith.constant 0 : index
    %c0_1 = arith.constant 0 : index
    %3 = vector.load %arg1[%c0, %c0_1] : memref<128x512xbf16, #tpu.memory_space<vmem>>, vector<128x512xbf16>
    %cst_2 = arith.constant dense<0.000000e+00> : vector<8x512xf32>
    %4 = tpu.matmul %2, %3, %cst_2 {dimension_numbers = #tpu.dot_dimension_numbers<[1], [0], [0], [1], [0, 0, 1, 1], [], []>} : vector<8x128xbf16>, vector<128x512xbf16>, vector<8x512xf32> -> vector<8x512xf32>
    %5 = arith.index_cast %c0_i32 : i32 to index
    %c0_3 = arith.constant 0 : index
    %c0_4 = arith.constant 0 : index
    %6 = vector.load %arg0[%5, %c0_3, %c0_4] : memref<9x8x512xf32, #tpu.memory_space<vmem>>, vector<1x8x512xf32>
    %7 = vector.shape_cast %6 : vector<1x8x512xf32> to vector<8x512xf32>
    %8 = arith.addf %4, %7 : vector<8x512xf32>
    %9 = vector.extract_strided_slice %8 {offsets = [0, 0], sizes = [8, 128], strides = [1, 1]} : vector<8x512xf32> to vector<8x128xf32>
    %cst_5 = arith.constant 5.000000e-01 : f32
    %10 = vector.broadcast %cst_5 : f32 to vector<8x128xf32>
    %11 = arith.mulf %10, %9 : vector<8x128xf32>
    %12 = math.tanh %11 : vector<8x128xf32>
    %cst_6 = arith.constant 5.000000e-01 : f32
    %13 = vector.broadcast %cst_6 : f32 to vector<8x128xf32>
    %14 = arith.mulf %13, %12 : vector<8x128xf32>
    %cst_7 = arith.constant 5.000000e-01 : f32
    %15 = vector.broadcast %cst_7 : f32 to vector<8x128xf32>
    %16 = arith.addf %14, %15 : vector<8x128xf32>
    %17 = vector.extract_strided_slice %8 {offsets = [0, 128], sizes = [8, 128], strides = [1, 1]} : vector<8x512xf32> to vector<8x128xf32>
    %cst_8 = arith.constant 5.000000e-01 : f32
    %18 = vector.broadcast %cst_8 : f32 to vector<8x128xf32>
    %19 = arith.mulf %18, %17 : vector<8x128xf32>
    %20 = math.tanh %19 : vector<8x128xf32>
    %cst_9 = arith.constant 5.000000e-01 : f32
    %21 = vector.broadcast %cst_9 : f32 to vector<8x128xf32>
    %22 = arith.mulf %21, %20 : vector<8x128xf32>
    %cst_10 = arith.constant 5.000000e-01 : f32
    %23 = vector.broadcast %cst_10 : f32 to vector<8x128xf32>
    %24 = arith.addf %22, %23 : vector<8x128xf32>
    %25 = vector.extract_strided_slice %8 {offsets = [0, 256], sizes = [8, 128], strides = [1, 1]} : vector<8x512xf32> to vector<8x128xf32>
    %26 = math.tanh %25 : vector<8x128xf32>
    %27 = vector.extract_strided_slice %8 {offsets = [0, 384], sizes = [8, 128], strides = [1, 1]} : vector<8x512xf32> to vector<8x128xf32>
    %cst_11 = arith.constant 5.000000e-01 : f32
    %28 = vector.broadcast %cst_11 : f32 to vector<8x128xf32>
    %29 = arith.mulf %28, %27 : vector<8x128xf32>
    %30 = math.tanh %29 : vector<8x128xf32>
    %cst_12 = arith.constant 5.000000e-01 : f32
    %31 = vector.broadcast %cst_12 : f32 to vector<8x128xf32>
    %32 = arith.mulf %31, %30 : vector<8x128xf32>
    %cst_13 = arith.constant 5.000000e-01 : f32
    %33 = vector.broadcast %cst_13 : f32 to vector<8x128xf32>
    %34 = arith.addf %32, %33 : vector<8x128xf32>
    %35 = arith.mulf %24, %1 : vector<8x128xf32>
    %36 = arith.mulf %16, %26 : vector<8x128xf32>
    %37 = arith.addf %35, %36 : vector<8x128xf32>
    %38 = math.tanh %37 : vector<8x128xf32>
    %39 = arith.mulf %34, %38 : vector<8x128xf32>
    %c1_i32 = arith.constant 1 : i32
    %40 = arith.truncf %39 : vector<8x128xf32> to vector<8x128xbf16>
    %c0_14 = arith.constant 0 : index
    %c0_15 = arith.constant 0 : index
    %41 = vector.load %arg1[%c0_14, %c0_15] : memref<128x512xbf16, #tpu.memory_space<vmem>>, vector<128x512xbf16>
    %cst_16 = arith.constant dense<0.000000e+00> : vector<8x512xf32>
    %42 = tpu.matmul %40, %41, %cst_16 {dimension_numbers = #tpu.dot_dimension_numbers<[1], [0], [0], [1], [0, 0, 1, 1], [], []>} : vector<8x128xbf16>, vector<128x512xbf16>, vector<8x512xf32> -> vector<8x512xf32>
    %43 = arith.index_cast %c1_i32 : i32 to index
    %c0_17 = arith.constant 0 : index
    %c0_18 = arith.constant 0 : index
    %44 = vector.load %arg0[%43, %c0_17, %c0_18] : memref<9x8x512xf32, #tpu.memory_space<vmem>>, vector<1x8x512xf32>
    %45 = vector.shape_cast %44 : vector<1x8x512xf32> to vector<8x512xf32>
    %46 = arith.addf %42, %45 : vector<8x512xf32>
    %47 = vector.extract_strided_slice %46 {offsets = [0, 0], sizes = [8, 128], strides = [1, 1]} : vector<8x512xf32> to vector<8x128xf32>
    %cst_19 = arith.constant 5.000000e-01 : f32
    %48 = vector.broadcast %cst_19 : f32 to vector<8x128xf32>
    %49 = arith.mulf %48, %47 : vector<8x128xf32>
    %50 = math.tanh %49 : vector<8x128xf32>
    %cst_20 = arith.constant 5.000000e-01 : f32
    %51 = vector.broadcast %cst_20 : f32 to vector<8x128xf32>
    %52 = arith.mulf %51, %50 : vector<8x128xf32>
    %cst_21 = arith.constant 5.000000e-01 : f32
    %53 = vector.broadcast %cst_21 : f32 to vector<8x128xf32>
    %54 = arith.addf %52, %53 : vector<8x128xf32>
    %55 = vector.extract_strided_slice %46 {offsets = [0, 128], sizes = [8, 128], strides = [1, 1]} : vector<8x512xf32> to vector<8x128xf32>
    %cst_22 = arith.constant 5.000000e-01 : f32
    %56 = vector.broadcast %cst_22 : f32 to vector<8x128xf32>
    %57 = arith.mulf %56, %55 : vector<8x128xf32>
    %58 = math.tanh %57 : vector<8x128xf32>
    %cst_23 = arith.constant 5.000000e-01 : f32
    %59 = vector.broadcast %cst_23 : f32 to vector<8x128xf32>
    %60 = arith.mulf %59, %58 : vector<8x128xf32>
    %cst_24 = arith.constant 5.000000e-01 : f32
    %61 = vector.broadcast %cst_24 : f32 to vector<8x128xf32>
    %62 = arith.addf %60, %61 : vector<8x128xf32>
    %63 = vector.extract_strided_slice %46 {offsets = [0, 256], sizes = [8, 128], strides = [1, 1]} : vector<8x512xf32> to vector<8x128xf32>
    %64 = math.tanh %63 : vector<8x128xf32>
    %65 = vector.extract_strided_slice %46 {offsets = [0, 384], sizes = [8, 128], strides = [1, 1]} : vector<8x512xf32> to vector<8x128xf32>
    %cst_25 = arith.constant 5.000000e-01 : f32
    %66 = vector.broadcast %cst_25 : f32 to vector<8x128xf32>
    %67 = arith.mulf %66, %65 : vector<8x128xf32>
    %68 = math.tanh %67 : vector<8x128xf32>
    %cst_26 = arith.constant 5.000000e-01 : f32
    %69 = vector.broadcast %cst_26 : f32 to vector<8x128xf32>
    %70 = arith.mulf %69, %68 : vector<8x128xf32>
    %cst_27 = arith.constant 5.000000e-01 : f32
    %71 = vector.broadcast %cst_27 : f32 to vector<8x128xf32>
    %72 = arith.addf %70, %71 : vector<8x128xf32>
    %73 = arith.mulf %62, %37 : vector<8x128xf32>
    %74 = arith.mulf %54, %64 : vector<8x128xf32>
    %75 = arith.addf %73, %74 : vector<8x128xf32>
    %76 = math.tanh %75 : vector<8x128xf32>
    %77 = arith.mulf %72, %76 : vector<8x128xf32>
    %c2_i32 = arith.constant 2 : i32
    %78 = arith.truncf %77 : vector<8x128xf32> to vector<8x128xbf16>
    %c0_28 = arith.constant 0 : index
    %c0_29 = arith.constant 0 : index
    %79 = vector.load %arg1[%c0_28, %c0_29] : memref<128x512xbf16, #tpu.memory_space<vmem>>, vector<128x512xbf16>
    %cst_30 = arith.constant dense<0.000000e+00> : vector<8x512xf32>
    %80 = tpu.matmul %78, %79, %cst_30 {dimension_numbers = #tpu.dot_dimension_numbers<[1], [0], [0], [1], [0, 0, 1, 1], [], []>} : vector<8x128xbf16>, vector<128x512xbf16>, vector<8x512xf32> -> vector<8x512xf32>
    %81 = arith.index_cast %c2_i32 : i32 to index
    %c0_31 = arith.constant 0 : index
    %c0_32 = arith.constant 0 : index
    %82 = vector.load %arg0[%81, %c0_31, %c0_32] : memref<9x8x512xf32, #tpu.memory_space<vmem>>, vector<1x8x512xf32>
    %83 = vector.shape_cast %82 : vector<1x8x512xf32> to vector<8x512xf32>
    %84 = arith.addf %80, %83 : vector<8x512xf32>
    %85 = vector.extract_strided_slice %84 {offsets = [0, 0], sizes = [8, 128], strides = [1, 1]} : vector<8x512xf32> to vector<8x128xf32>
    %cst_33 = arith.constant 5.000000e-01 : f32
    %86 = vector.broadcast %cst_33 : f32 to vector<8x128xf32>
    %87 = arith.mulf %86, %85 : vector<8x128xf32>
    %88 = math.tanh %87 : vector<8x128xf32>
    %cst_34 = arith.constant 5.000000e-01 : f32
    %89 = vector.broadcast %cst_34 : f32 to vector<8x128xf32>
    %90 = arith.mulf %89, %88 : vector<8x128xf32>
    %cst_35 = arith.constant 5.000000e-01 : f32
    %91 = vector.broadcast %cst_35 : f32 to vector<8x128xf32>
    %92 = arith.addf %90, %91 : vector<8x128xf32>
    %93 = vector.extract_strided_slice %84 {offsets = [0, 128], sizes = [8, 128], strides = [1, 1]} : vector<8x512xf32> to vector<8x128xf32>
    %cst_36 = arith.constant 5.000000e-01 : f32
    %94 = vector.broadcast %cst_36 : f32 to vector<8x128xf32>
    %95 = arith.mulf %94, %93 : vector<8x128xf32>
    %96 = math.tanh %95 : vector<8x128xf32>
    %cst_37 = arith.constant 5.000000e-01 : f32
    %97 = vector.broadcast %cst_37 : f32 to vector<8x128xf32>
    %98 = arith.mulf %97, %96 : vector<8x128xf32>
    %cst_38 = arith.constant 5.000000e-01 : f32
    %99 = vector.broadcast %cst_38 : f32 to vector<8x128xf32>
    %100 = arith.addf %98, %99 : vector<8x128xf32>
    %101 = vector.extract_strided_slice %84 {offsets = [0, 256], sizes = [8, 128], strides = [1, 1]} : vector<8x512xf32> to vector<8x128xf32>
    %102 = math.tanh %101 : vector<8x128xf32>
    %103 = vector.extract_strided_slice %84 {offsets = [0, 384], sizes = [8, 128], strides = [1, 1]} : vector<8x512xf32> to vector<8x128xf32>
    %cst_39 = arith.constant 5.000000e-01 : f32
    %104 = vector.broadcast %cst_39 : f32 to vector<8x128xf32>
    %105 = arith.mulf %104, %103 : vector<8x128xf32>
    %106 = math.tanh %105 : vector<8x128xf32>
    %cst_40 = arith.constant 5.000000e-01 : f32
    %107 = vector.broadcast %cst_40 : f32 to vector<8x128xf32>
    %108 = arith.mulf %107, %106 : vector<8x128xf32>
    %cst_41 = arith.constant 5.000000e-01 : f32
    %109 = vector.broadcast %cst_41 : f32 to vector<8x128xf32>
    %110 = arith.addf %108, %109 : vector<8x128xf32>
    %111 = arith.mulf %100, %75 : vector<8x128xf32>
    %112 = arith.mulf %92, %102 : vector<8x128xf32>
    %113 = arith.addf %111, %112 : vector<8x128xf32>
    %114 = math.tanh %113 : vector<8x128xf32>
    %115 = arith.mulf %110, %114 : vector<8x128xf32>
    %c3_i32 = arith.constant 3 : i32
    %116 = arith.truncf %115 : vector<8x128xf32> to vector<8x128xbf16>
    %c0_42 = arith.constant 0 : index
    %c0_43 = arith.constant 0 : index
    %117 = vector.load %arg1[%c0_42, %c0_43] : memref<128x512xbf16, #tpu.memory_space<vmem>>, vector<128x512xbf16>
    %cst_44 = arith.constant dense<0.000000e+00> : vector<8x512xf32>
    %118 = tpu.matmul %116, %117, %cst_44 {dimension_numbers = #tpu.dot_dimension_numbers<[1], [0], [0], [1], [0, 0, 1, 1], [], []>} : vector<8x128xbf16>, vector<128x512xbf16>, vector<8x512xf32> -> vector<8x512xf32>
    %119 = arith.index_cast %c3_i32 : i32 to index
    %c0_45 = arith.constant 0 : index
    %c0_46 = arith.constant 0 : index
    %120 = vector.load %arg0[%119, %c0_45, %c0_46] : memref<9x8x512xf32, #tpu.memory_space<vmem>>, vector<1x8x512xf32>
    %121 = vector.shape_cast %120 : vector<1x8x512xf32> to vector<8x512xf32>
    %122 = arith.addf %118, %121 : vector<8x512xf32>
    %123 = vector.extract_strided_slice %122 {offsets = [0, 0], sizes = [8, 128], strides = [1, 1]} : vector<8x512xf32> to vector<8x128xf32>
    %cst_47 = arith.constant 5.000000e-01 : f32
    %124 = vector.broadcast %cst_47 : f32 to vector<8x128xf32>
    %125 = arith.mulf %124, %123 : vector<8x128xf32>
    %126 = math.tanh %125 : vector<8x128xf32>
    %cst_48 = arith.constant 5.000000e-01 : f32
    %127 = vector.broadcast %cst_48 : f32 to vector<8x128xf32>
    %128 = arith.mulf %127, %126 : vector<8x128xf32>
    %cst_49 = arith.constant 5.000000e-01 : f32
    %129 = vector.broadcast %cst_49 : f32 to vector<8x128xf32>
    %130 = arith.addf %128, %129 : vector<8x128xf32>
    %131 = vector.extract_strided_slice %122 {offsets = [0, 128], sizes = [8, 128], strides = [1, 1]} : vector<8x512xf32> to vector<8x128xf32>
    %cst_50 = arith.constant 5.000000e-01 : f32
    %132 = vector.broadcast %cst_50 : f32 to vector<8x128xf32>
    %133 = arith.mulf %132, %131 : vector<8x128xf32>
    %134 = math.tanh %133 : vector<8x128xf32>
    %cst_51 = arith.constant 5.000000e-01 : f32
    %135 = vector.broadcast %cst_51 : f32 to vector<8x128xf32>
    %136 = arith.mulf %135, %134 : vector<8x128xf32>
    %cst_52 = arith.constant 5.000000e-01 : f32
    %137 = vector.broadcast %cst_52 : f32 to vector<8x128xf32>
    %138 = arith.addf %136, %137 : vector<8x128xf32>
    %139 = vector.extract_strided_slice %122 {offsets = [0, 256], sizes = [8, 128], strides = [1, 1]} : vector<8x512xf32> to vector<8x128xf32>
    %140 = math.tanh %139 : vector<8x128xf32>
    %141 = vector.extract_strided_slice %122 {offsets = [0, 384], sizes = [8, 128], strides = [1, 1]} : vector<8x512xf32> to vector<8x128xf32>
    %cst_53 = arith.constant 5.000000e-01 : f32
    %142 = vector.broadcast %cst_53 : f32 to vector<8x128xf32>
    %143 = arith.mulf %142, %141 : vector<8x128xf32>
    %144 = math.tanh %143 : vector<8x128xf32>
    %cst_54 = arith.constant 5.000000e-01 : f32
    %145 = vector.broadcast %cst_54 : f32 to vector<8x128xf32>
    %146 = arith.mulf %145, %144 : vector<8x128xf32>
    %cst_55 = arith.constant 5.000000e-01 : f32
    %147 = vector.broadcast %cst_55 : f32 to vector<8x128xf32>
    %148 = arith.addf %146, %147 : vector<8x128xf32>
    %149 = arith.mulf %138, %113 : vector<8x128xf32>
    %150 = arith.mulf %130, %140 : vector<8x128xf32>
    %151 = arith.addf %149, %150 : vector<8x128xf32>
    %152 = math.tanh %151 : vector<8x128xf32>
    %153 = arith.mulf %148, %152 : vector<8x128xf32>
    %c4_i32 = arith.constant 4 : i32
    %154 = arith.truncf %153 : vector<8x128xf32> to vector<8x128xbf16>
    %c0_56 = arith.constant 0 : index
    %c0_57 = arith.constant 0 : index
    %155 = vector.load %arg1[%c0_56, %c0_57] : memref<128x512xbf16, #tpu.memory_space<vmem>>, vector<128x512xbf16>
    %cst_58 = arith.constant dense<0.000000e+00> : vector<8x512xf32>
    %156 = tpu.matmul %154, %155, %cst_58 {dimension_numbers = #tpu.dot_dimension_numbers<[1], [0], [0], [1], [0, 0, 1, 1], [], []>} : vector<8x128xbf16>, vector<128x512xbf16>, vector<8x512xf32> -> vector<8x512xf32>
    %157 = arith.index_cast %c4_i32 : i32 to index
    %c0_59 = arith.constant 0 : index
    %c0_60 = arith.constant 0 : index
    %158 = vector.load %arg0[%157, %c0_59, %c0_60] : memref<9x8x512xf32, #tpu.memory_space<vmem>>, vector<1x8x512xf32>
    %159 = vector.shape_cast %158 : vector<1x8x512xf32> to vector<8x512xf32>
    %160 = arith.addf %156, %159 : vector<8x512xf32>
    %161 = vector.extract_strided_slice %160 {offsets = [0, 0], sizes = [8, 128], strides = [1, 1]} : vector<8x512xf32> to vector<8x128xf32>
    %cst_61 = arith.constant 5.000000e-01 : f32
    %162 = vector.broadcast %cst_61 : f32 to vector<8x128xf32>
    %163 = arith.mulf %162, %161 : vector<8x128xf32>
    %164 = math.tanh %163 : vector<8x128xf32>
    %cst_62 = arith.constant 5.000000e-01 : f32
    %165 = vector.broadcast %cst_62 : f32 to vector<8x128xf32>
    %166 = arith.mulf %165, %164 : vector<8x128xf32>
    %cst_63 = arith.constant 5.000000e-01 : f32
    %167 = vector.broadcast %cst_63 : f32 to vector<8x128xf32>
    %168 = arith.addf %166, %167 : vector<8x128xf32>
    %169 = vector.extract_strided_slice %160 {offsets = [0, 128], sizes = [8, 128], strides = [1, 1]} : vector<8x512xf32> to vector<8x128xf32>
    %cst_64 = arith.constant 5.000000e-01 : f32
    %170 = vector.broadcast %cst_64 : f32 to vector<8x128xf32>
    %171 = arith.mulf %170, %169 : vector<8x128xf32>
    %172 = math.tanh %171 : vector<8x128xf32>
    %cst_65 = arith.constant 5.000000e-01 : f32
    %173 = vector.broadcast %cst_65 : f32 to vector<8x128xf32>
    %174 = arith.mulf %173, %172 : vector<8x128xf32>
    %cst_66 = arith.constant 5.000000e-01 : f32
    %175 = vector.broadcast %cst_66 : f32 to vector<8x128xf32>
    %176 = arith.addf %174, %175 : vector<8x128xf32>
    %177 = vector.extract_strided_slice %160 {offsets = [0, 256], sizes = [8, 128], strides = [1, 1]} : vector<8x512xf32> to vector<8x128xf32>
    %178 = math.tanh %177 : vector<8x128xf32>
    %179 = vector.extract_strided_slice %160 {offsets = [0, 384], sizes = [8, 128], strides = [1, 1]} : vector<8x512xf32> to vector<8x128xf32>
    %cst_67 = arith.constant 5.000000e-01 : f32
    %180 = vector.broadcast %cst_67 : f32 to vector<8x128xf32>
    %181 = arith.mulf %180, %179 : vector<8x128xf32>
    %182 = math.tanh %181 : vector<8x128xf32>
    %cst_68 = arith.constant 5.000000e-01 : f32
    %183 = vector.broadcast %cst_68 : f32 to vector<8x128xf32>
    %184 = arith.mulf %183, %182 : vector<8x128xf32>
    %cst_69 = arith.constant 5.000000e-01 : f32
    %185 = vector.broadcast %cst_69 : f32 to vector<8x128xf32>
    %186 = arith.addf %184, %185 : vector<8x128xf32>
    %187 = arith.mulf %176, %151 : vector<8x128xf32>
    %188 = arith.mulf %168, %178 : vector<8x128xf32>
    %189 = arith.addf %187, %188 : vector<8x128xf32>
    %190 = math.tanh %189 : vector<8x128xf32>
    %191 = arith.mulf %186, %190 : vector<8x128xf32>
    %c5_i32 = arith.constant 5 : i32
    %192 = arith.truncf %191 : vector<8x128xf32> to vector<8x128xbf16>
    %c0_70 = arith.constant 0 : index
    %c0_71 = arith.constant 0 : index
    %193 = vector.load %arg1[%c0_70, %c0_71] : memref<128x512xbf16, #tpu.memory_space<vmem>>, vector<128x512xbf16>
    %cst_72 = arith.constant dense<0.000000e+00> : vector<8x512xf32>
    %194 = tpu.matmul %192, %193, %cst_72 {dimension_numbers = #tpu.dot_dimension_numbers<[1], [0], [0], [1], [0, 0, 1, 1], [], []>} : vector<8x128xbf16>, vector<128x512xbf16>, vector<8x512xf32> -> vector<8x512xf32>
    %195 = arith.index_cast %c5_i32 : i32 to index
    %c0_73 = arith.constant 0 : index
    %c0_74 = arith.constant 0 : index
    %196 = vector.load %arg0[%195, %c0_73, %c0_74] : memref<9x8x512xf32, #tpu.memory_space<vmem>>, vector<1x8x512xf32>
    %197 = vector.shape_cast %196 : vector<1x8x512xf32> to vector<8x512xf32>
    %198 = arith.addf %194, %197 : vector<8x512xf32>
    %199 = vector.extract_strided_slice %198 {offsets = [0, 0], sizes = [8, 128], strides = [1, 1]} : vector<8x512xf32> to vector<8x128xf32>
    %cst_75 = arith.constant 5.000000e-01 : f32
    %200 = vector.broadcast %cst_75 : f32 to vector<8x128xf32>
    %201 = arith.mulf %200, %199 : vector<8x128xf32>
    %202 = math.tanh %201 : vector<8x128xf32>
    %cst_76 = arith.constant 5.000000e-01 : f32
    %203 = vector.broadcast %cst_76 : f32 to vector<8x128xf32>
    %204 = arith.mulf %203, %202 : vector<8x128xf32>
    %cst_77 = arith.constant 5.000000e-01 : f32
    %205 = vector.broadcast %cst_77 : f32 to vector<8x128xf32>
    %206 = arith.addf %204, %205 : vector<8x128xf32>
    %207 = vector.extract_strided_slice %198 {offsets = [0, 128], sizes = [8, 128], strides = [1, 1]} : vector<8x512xf32> to vector<8x128xf32>
    %cst_78 = arith.constant 5.000000e-01 : f32
    %208 = vector.broadcast %cst_78 : f32 to vector<8x128xf32>
    %209 = arith.mulf %208, %207 : vector<8x128xf32>
    %210 = math.tanh %209 : vector<8x128xf32>
    %cst_79 = arith.constant 5.000000e-01 : f32
    %211 = vector.broadcast %cst_79 : f32 to vector<8x128xf32>
    %212 = arith.mulf %211, %210 : vector<8x128xf32>
    %cst_80 = arith.constant 5.000000e-01 : f32
    %213 = vector.broadcast %cst_80 : f32 to vector<8x128xf32>
    %214 = arith.addf %212, %213 : vector<8x128xf32>
    %215 = vector.extract_strided_slice %198 {offsets = [0, 256], sizes = [8, 128], strides = [1, 1]} : vector<8x512xf32> to vector<8x128xf32>
    %216 = math.tanh %215 : vector<8x128xf32>
    %217 = vector.extract_strided_slice %198 {offsets = [0, 384], sizes = [8, 128], strides = [1, 1]} : vector<8x512xf32> to vector<8x128xf32>
    %cst_81 = arith.constant 5.000000e-01 : f32
    %218 = vector.broadcast %cst_81 : f32 to vector<8x128xf32>
    %219 = arith.mulf %218, %217 : vector<8x128xf32>
    %220 = math.tanh %219 : vector<8x128xf32>
    %cst_82 = arith.constant 5.000000e-01 : f32
    %221 = vector.broadcast %cst_82 : f32 to vector<8x128xf32>
    %222 = arith.mulf %221, %220 : vector<8x128xf32>
    %cst_83 = arith.constant 5.000000e-01 : f32
    %223 = vector.broadcast %cst_83 : f32 to vector<8x128xf32>
    %224 = arith.addf %222, %223 : vector<8x128xf32>
    %225 = arith.mulf %214, %189 : vector<8x128xf32>
    %226 = arith.mulf %206, %216 : vector<8x128xf32>
    %227 = arith.addf %225, %226 : vector<8x128xf32>
    %228 = math.tanh %227 : vector<8x128xf32>
    %229 = arith.mulf %224, %228 : vector<8x128xf32>
    %c6_i32 = arith.constant 6 : i32
    %230 = arith.truncf %229 : vector<8x128xf32> to vector<8x128xbf16>
    %c0_84 = arith.constant 0 : index
    %c0_85 = arith.constant 0 : index
    %231 = vector.load %arg1[%c0_84, %c0_85] : memref<128x512xbf16, #tpu.memory_space<vmem>>, vector<128x512xbf16>
    %cst_86 = arith.constant dense<0.000000e+00> : vector<8x512xf32>
    %232 = tpu.matmul %230, %231, %cst_86 {dimension_numbers = #tpu.dot_dimension_numbers<[1], [0], [0], [1], [0, 0, 1, 1], [], []>} : vector<8x128xbf16>, vector<128x512xbf16>, vector<8x512xf32> -> vector<8x512xf32>
    %233 = arith.index_cast %c6_i32 : i32 to index
    %c0_87 = arith.constant 0 : index
    %c0_88 = arith.constant 0 : index
    %234 = vector.load %arg0[%233, %c0_87, %c0_88] : memref<9x8x512xf32, #tpu.memory_space<vmem>>, vector<1x8x512xf32>
    %235 = vector.shape_cast %234 : vector<1x8x512xf32> to vector<8x512xf32>
    %236 = arith.addf %232, %235 : vector<8x512xf32>
    %237 = vector.extract_strided_slice %236 {offsets = [0, 0], sizes = [8, 128], strides = [1, 1]} : vector<8x512xf32> to vector<8x128xf32>
    %cst_89 = arith.constant 5.000000e-01 : f32
    %238 = vector.broadcast %cst_89 : f32 to vector<8x128xf32>
    %239 = arith.mulf %238, %237 : vector<8x128xf32>
    %240 = math.tanh %239 : vector<8x128xf32>
    %cst_90 = arith.constant 5.000000e-01 : f32
    %241 = vector.broadcast %cst_90 : f32 to vector<8x128xf32>
    %242 = arith.mulf %241, %240 : vector<8x128xf32>
    %cst_91 = arith.constant 5.000000e-01 : f32
    %243 = vector.broadcast %cst_91 : f32 to vector<8x128xf32>
    %244 = arith.addf %242, %243 : vector<8x128xf32>
    %245 = vector.extract_strided_slice %236 {offsets = [0, 128], sizes = [8, 128], strides = [1, 1]} : vector<8x512xf32> to vector<8x128xf32>
    %cst_92 = arith.constant 5.000000e-01 : f32
    %246 = vector.broadcast %cst_92 : f32 to vector<8x128xf32>
    %247 = arith.mulf %246, %245 : vector<8x128xf32>
    %248 = math.tanh %247 : vector<8x128xf32>
    %cst_93 = arith.constant 5.000000e-01 : f32
    %249 = vector.broadcast %cst_93 : f32 to vector<8x128xf32>
    %250 = arith.mulf %249, %248 : vector<8x128xf32>
    %cst_94 = arith.constant 5.000000e-01 : f32
    %251 = vector.broadcast %cst_94 : f32 to vector<8x128xf32>
    %252 = arith.addf %250, %251 : vector<8x128xf32>
    %253 = vector.extract_strided_slice %236 {offsets = [0, 256], sizes = [8, 128], strides = [1, 1]} : vector<8x512xf32> to vector<8x128xf32>
    %254 = math.tanh %253 : vector<8x128xf32>
    %255 = vector.extract_strided_slice %236 {offsets = [0, 384], sizes = [8, 128], strides = [1, 1]} : vector<8x512xf32> to vector<8x128xf32>
    %cst_95 = arith.constant 5.000000e-01 : f32
    %256 = vector.broadcast %cst_95 : f32 to vector<8x128xf32>
    %257 = arith.mulf %256, %255 : vector<8x128xf32>
    %258 = math.tanh %257 : vector<8x128xf32>
    %cst_96 = arith.constant 5.000000e-01 : f32
    %259 = vector.broadcast %cst_96 : f32 to vector<8x128xf32>
    %260 = arith.mulf %259, %258 : vector<8x128xf32>
    %cst_97 = arith.constant 5.000000e-01 : f32
    %261 = vector.broadcast %cst_97 : f32 to vector<8x128xf32>
    %262 = arith.addf %260, %261 : vector<8x128xf32>
    %263 = arith.mulf %252, %227 : vector<8x128xf32>
    %264 = arith.mulf %244, %254 : vector<8x128xf32>
    %265 = arith.addf %263, %264 : vector<8x128xf32>
    %266 = math.tanh %265 : vector<8x128xf32>
    %267 = arith.mulf %262, %266 : vector<8x128xf32>
    %c7_i32 = arith.constant 7 : i32
    %268 = arith.truncf %267 : vector<8x128xf32> to vector<8x128xbf16>
    %c0_98 = arith.constant 0 : index
    %c0_99 = arith.constant 0 : index
    %269 = vector.load %arg1[%c0_98, %c0_99] : memref<128x512xbf16, #tpu.memory_space<vmem>>, vector<128x512xbf16>
    %cst_100 = arith.constant dense<0.000000e+00> : vector<8x512xf32>
    %270 = tpu.matmul %268, %269, %cst_100 {dimension_numbers = #tpu.dot_dimension_numbers<[1], [0], [0], [1], [0, 0, 1, 1], [], []>} : vector<8x128xbf16>, vector<128x512xbf16>, vector<8x512xf32> -> vector<8x512xf32>
    %271 = arith.index_cast %c7_i32 : i32 to index
    %c0_101 = arith.constant 0 : index
    %c0_102 = arith.constant 0 : index
    %272 = vector.load %arg0[%271, %c0_101, %c0_102] : memref<9x8x512xf32, #tpu.memory_space<vmem>>, vector<1x8x512xf32>
    %273 = vector.shape_cast %272 : vector<1x8x512xf32> to vector<8x512xf32>
    %274 = arith.addf %270, %273 : vector<8x512xf32>
    %275 = vector.extract_strided_slice %274 {offsets = [0, 0], sizes = [8, 128], strides = [1, 1]} : vector<8x512xf32> to vector<8x128xf32>
    %cst_103 = arith.constant 5.000000e-01 : f32
    %276 = vector.broadcast %cst_103 : f32 to vector<8x128xf32>
    %277 = arith.mulf %276, %275 : vector<8x128xf32>
    %278 = math.tanh %277 : vector<8x128xf32>
    %cst_104 = arith.constant 5.000000e-01 : f32
    %279 = vector.broadcast %cst_104 : f32 to vector<8x128xf32>
    %280 = arith.mulf %279, %278 : vector<8x128xf32>
    %cst_105 = arith.constant 5.000000e-01 : f32
    %281 = vector.broadcast %cst_105 : f32 to vector<8x128xf32>
    %282 = arith.addf %280, %281 : vector<8x128xf32>
    %283 = vector.extract_strided_slice %274 {offsets = [0, 128], sizes = [8, 128], strides = [1, 1]} : vector<8x512xf32> to vector<8x128xf32>
    %cst_106 = arith.constant 5.000000e-01 : f32
    %284 = vector.broadcast %cst_106 : f32 to vector<8x128xf32>
    %285 = arith.mulf %284, %283 : vector<8x128xf32>
    %286 = math.tanh %285 : vector<8x128xf32>
    %cst_107 = arith.constant 5.000000e-01 : f32
    %287 = vector.broadcast %cst_107 : f32 to vector<8x128xf32>
    %288 = arith.mulf %287, %286 : vector<8x128xf32>
    %cst_108 = arith.constant 5.000000e-01 : f32
    %289 = vector.broadcast %cst_108 : f32 to vector<8x128xf32>
    %290 = arith.addf %288, %289 : vector<8x128xf32>
    %291 = vector.extract_strided_slice %274 {offsets = [0, 256], sizes = [8, 128], strides = [1, 1]} : vector<8x512xf32> to vector<8x128xf32>
    %292 = math.tanh %291 : vector<8x128xf32>
    %293 = vector.extract_strided_slice %274 {offsets = [0, 384], sizes = [8, 128], strides = [1, 1]} : vector<8x512xf32> to vector<8x128xf32>
    %cst_109 = arith.constant 5.000000e-01 : f32
    %294 = vector.broadcast %cst_109 : f32 to vector<8x128xf32>
    %295 = arith.mulf %294, %293 : vector<8x128xf32>
    %296 = math.tanh %295 : vector<8x128xf32>
    %cst_110 = arith.constant 5.000000e-01 : f32
    %297 = vector.broadcast %cst_110 : f32 to vector<8x128xf32>
    %298 = arith.mulf %297, %296 : vector<8x128xf32>
    %cst_111 = arith.constant 5.000000e-01 : f32
    %299 = vector.broadcast %cst_111 : f32 to vector<8x128xf32>
    %300 = arith.addf %298, %299 : vector<8x128xf32>
    %301 = arith.mulf %290, %265 : vector<8x128xf32>
    %302 = arith.mulf %282, %292 : vector<8x128xf32>
    %303 = arith.addf %301, %302 : vector<8x128xf32>
    %304 = math.tanh %303 : vector<8x128xf32>
    %305 = arith.mulf %300, %304 : vector<8x128xf32>
    %c8_i32 = arith.constant 8 : i32
    %306 = arith.truncf %305 : vector<8x128xf32> to vector<8x128xbf16>
    %c0_112 = arith.constant 0 : index
    %c0_113 = arith.constant 0 : index
    %307 = vector.load %arg1[%c0_112, %c0_113] : memref<128x512xbf16, #tpu.memory_space<vmem>>, vector<128x512xbf16>
    %cst_114 = arith.constant dense<0.000000e+00> : vector<8x512xf32>
    %308 = tpu.matmul %306, %307, %cst_114 {dimension_numbers = #tpu.dot_dimension_numbers<[1], [0], [0], [1], [0, 0, 1, 1], [], []>} : vector<8x128xbf16>, vector<128x512xbf16>, vector<8x512xf32> -> vector<8x512xf32>
    %309 = arith.index_cast %c8_i32 : i32 to index
    %c0_115 = arith.constant 0 : index
    %c0_116 = arith.constant 0 : index
    %310 = vector.load %arg0[%309, %c0_115, %c0_116] : memref<9x8x512xf32, #tpu.memory_space<vmem>>, vector<1x8x512xf32>
    %311 = vector.shape_cast %310 : vector<1x8x512xf32> to vector<8x512xf32>
    %312 = arith.addf %308, %311 : vector<8x512xf32>
    %313 = vector.extract_strided_slice %312 {offsets = [0, 0], sizes = [8, 128], strides = [1, 1]} : vector<8x512xf32> to vector<8x128xf32>
    %cst_117 = arith.constant 5.000000e-01 : f32
    %314 = vector.broadcast %cst_117 : f32 to vector<8x128xf32>
    %315 = arith.mulf %314, %313 : vector<8x128xf32>
    %316 = math.tanh %315 : vector<8x128xf32>
    %cst_118 = arith.constant 5.000000e-01 : f32
    %317 = vector.broadcast %cst_118 : f32 to vector<8x128xf32>
    %318 = arith.mulf %317, %316 : vector<8x128xf32>
    %cst_119 = arith.constant 5.000000e-01 : f32
    %319 = vector.broadcast %cst_119 : f32 to vector<8x128xf32>
    %320 = arith.addf %318, %319 : vector<8x128xf32>
    %321 = vector.extract_strided_slice %312 {offsets = [0, 128], sizes = [8, 128], strides = [1, 1]} : vector<8x512xf32> to vector<8x128xf32>
    %cst_120 = arith.constant 5.000000e-01 : f32
    %322 = vector.broadcast %cst_120 : f32 to vector<8x128xf32>
    %323 = arith.mulf %322, %321 : vector<8x128xf32>
    %324 = math.tanh %323 : vector<8x128xf32>
    %cst_121 = arith.constant 5.000000e-01 : f32
    %325 = vector.broadcast %cst_121 : f32 to vector<8x128xf32>
    %326 = arith.mulf %325, %324 : vector<8x128xf32>
    %cst_122 = arith.constant 5.000000e-01 : f32
    %327 = vector.broadcast %cst_122 : f32 to vector<8x128xf32>
    %328 = arith.addf %326, %327 : vector<8x128xf32>
    %329 = vector.extract_strided_slice %312 {offsets = [0, 256], sizes = [8, 128], strides = [1, 1]} : vector<8x512xf32> to vector<8x128xf32>
    %330 = math.tanh %329 : vector<8x128xf32>
    %331 = vector.extract_strided_slice %312 {offsets = [0, 384], sizes = [8, 128], strides = [1, 1]} : vector<8x512xf32> to vector<8x128xf32>
    %cst_123 = arith.constant 5.000000e-01 : f32
    %332 = vector.broadcast %cst_123 : f32 to vector<8x128xf32>
    %333 = arith.mulf %332, %331 : vector<8x128xf32>
    %334 = math.tanh %333 : vector<8x128xf32>
    %cst_124 = arith.constant 5.000000e-01 : f32
    %335 = vector.broadcast %cst_124 : f32 to vector<8x128xf32>
    %336 = arith.mulf %335, %334 : vector<8x128xf32>
    %cst_125 = arith.constant 5.000000e-01 : f32
    %337 = vector.broadcast %cst_125 : f32 to vector<8x128xf32>
    %338 = arith.addf %336, %337 : vector<8x128xf32>
    %339 = arith.mulf %328, %303 : vector<8x128xf32>
    %340 = arith.mulf %320, %330 : vector<8x128xf32>
    %341 = arith.addf %339, %340 : vector<8x128xf32>
    %342 = math.tanh %341 : vector<8x128xf32>
    %343 = arith.mulf %338, %342 : vector<8x128xf32>
    %c9_i32 = arith.constant 9 : i32
    %c0_126 = arith.constant 0 : index
    %c0_127 = arith.constant 0 : index
    %344 = vector.load %arg2[%c0_126, %c0_127] : memref<128x128xf32, #tpu.memory_space<vmem>>, vector<128x128xf32>
    %cst_128 = arith.constant dense<0.000000e+00> : vector<8x128xf32>
    %345 = tpu.matmul %343, %344, %cst_128 {dimension_numbers = #tpu.dot_dimension_numbers<[1], [0], [0], [1], [0, 0, 1, 1], [], []>} : vector<8x128xf32>, vector<128x128xf32>, vector<8x128xf32> -> vector<8x128xf32>
    %c0_129 = arith.constant 0 : index
    %c0_130 = arith.constant 0 : index
    %346 = vector.load %arg3[%c0_129, %c0_130] : memref<1x128xf32, #tpu.memory_space<vmem>>, vector<1x128xf32>
    %347 = vector.broadcast %346 : vector<1x128xf32> to vector<8x128xf32>
    %348 = arith.addf %345, %347 : vector<8x128xf32>
    %c0_131 = arith.constant 0 : index
    %c0_132 = arith.constant 0 : index
    %349 = vector.load %arg4[%c0_131, %c0_132] : memref<8x128xf32, #tpu.memory_space<vmem>>, vector<8x128xf32>
    tpu.vector_store %arg4[%c0_131, %c0_132], %348 {strides = array<i32>} : memref<8x128xf32, #tpu.memory_space<vmem>>, vector<8x128xf32>,
    return
  }
}

</mosaic_0001>

<llo_original>
// kernel: tpu_custom_call.1
$region0: #{tpu_custom_call.1}
  #allocation0 [shape = 'u32[]', space=smem, size = 0x4, offset = 0x4, fixed_abs, tag = 'smem constant byte address 0x4 - core index']
  #allocation1 [shape = 'u32[72,128]{1,0:T(1,128)}', space=vmem, size = 0x9000, scoped, tag = 'internal scratch']
  %s0 = inlined_call_operand.hbm [shape: f32[9,8,512], index: 0, kind: input, shape index: {}]
  %s1 = inlined_call_operand.hbm [shape: bf16[128,512], index: 1, kind: input, shape index: {}]
  %s2 = inlined_call_operand.hbm [shape: f32[128,128], index: 2, kind: input, shape index: {}]
  %s3 = inlined_call_operand.vmem [shape: f32[1,128], index: 3, kind: input, shape index: {}]
  %s4 = inlined_call_operand.hbm [shape: f32[8,128], index: 4, kind: output, shape index: {}]
  %s5 = sld [smem:[#allocation0]]
  $region38: #{tpu_custom_call.1} parent=0
    _
  %s7 = ssub.s32 1, %s5
  %s8 = scalar_select 0, %s7, %s5
  $region1: #{tpu_custom_call.1} parent=0
    #allocation2 [shape = 'u8[147456]{0}', space=vmem, size = 0x24000, scoped, tag = 'input window, operand 0, single buffered']
    #allocation3 [shape = 's32[1]{0}', space=sflag, size = 0x4, scoped, tag = 'scoped memory for tpu_custom_call.1']
    #allocation4 [shape = 's32[1]{0}', space=sflag, size = 0x4, scoped, tag = 'scoped memory for tpu_custom_call.1']
    #allocation5 [shape = 'u8[131072]{0}', space=vmem, size = 0x20000, scoped, tag = 'input window, operand 1, single buffered']
    #allocation6 [shape = 's32[1]{0}', space=sflag, size = 0x4, scoped, tag = 'scoped memory for tpu_custom_call.1']
    #allocation7 [shape = 'u8[65536]{0}', space=vmem, size = 0x10000, scoped, tag = 'input window, operand 2, single buffered']
    #allocation8 [shape = 'u8[4096]{0}', space=vmem, size = 0x1000, scoped, tag = 'output window, operand 0, single buffered']
    %9 = vsyncpa [#allocation3], 0
    %10 = vsyncpa [#allocation6], 0
    %11 = vsyncpa [#allocation4], 0
    // Predicated region
    $region2: #{tpu_custom_call.1} parent=1 // pred_check
      _
    $region3: #{tpu_custom_call.1} parent=1 // pred_check_branch
      %13 = sbr.rel (0) target = $region5
    $region4: #{tpu_custom_call.1} parent=1 // pred_region
      %15 = vsyncadd [#allocation3], 0
      %s16 = sshll.u32 %s0, 4
      %s17 = int_to_ptr.hbm [resolvable:$true] %s16
      %s18 = sshll.u32 [#allocation2], 4
      %s19 = int_to_ptr.vmem [resolvable:$true] %s18
      %24 = dma.hbm_to_vmem [thread:$0]  %s17, 4608, %s19, [#allocation3], 512, 512, 32
    $region5: #{tpu_custom_call.1} parent=1 // pred_fallthru
      _
    // Predicated region
    $region6: #{tpu_custom_call.1} parent=1 // pred_check
      _
    $region7: #{tpu_custom_call.1} parent=1 // pred_check_branch
      %26 = sbr.rel (0) target = $region9
    $region8: #{tpu_custom_call.1} parent=1 // pred_region
      %28 = vsyncadd [#allocation6], 0
      %s29 = sshll.u32 %s1, 4
      %s30 = int_to_ptr.hbm [resolvable:$true] %s29
      %s31 = sshll.u32 [#allocation5], 4
      %s32 = int_to_ptr.vmem [resolvable:$true] %s31
      %37 = dma.hbm_to_vmem [thread:$0]  %s30, 4096, %s32, [#allocation6], 256, 256, 16
    $region9: #{tpu_custom_call.1} parent=1 // pred_fallthru
      _
    // Predicated region
    $region10: #{tpu_custom_call.1} parent=1 // pred_check
      _
    $region11: #{tpu_custom_call.1} parent=1 // pred_check_branch
      %39 = sbr.rel (0) target = $region13
    $region12: #{tpu_custom_call.1} parent=1 // pred_region
      %41 = vsyncadd [#allocation6], 0
      %s42 = sshll.u32 %s2, 4
      %s43 = int_to_ptr.hbm [resolvable:$true] %s42
      %s44 = sshll.u32 [#allocation7], 4
      %s45 = int_to_ptr.vmem [resolvable:$true] %s44
      %50 = dma.hbm_to_vmem [thread:$0]  %s43, 2048, %s45, [#allocation6], 128, 128, 8
    $region13: #{tpu_custom_call.1} parent=1 // pred_fallthru
      _
    // Predicated region
    $region14: #{tpu_custom_call.1} parent=1 // pred_check
      _
    $region15: #{tpu_custom_call.1} parent=1 // pred_check_branch
      %52 = sbr.rel (0) target = $region17
    $region16: #{tpu_custom_call.1} parent=1 // pred_region
      _
    $region17: #{tpu_custom_call.1} parent=1 // pred_fallthru
      _
    // Predicated region
    $region18: #{tpu_custom_call.1} parent=1 // pred_check
      _
    $region19: #{tpu_custom_call.1} parent=1 // pred_check_branch
      %54 = sbr.rel (0) target = $region21
    $region20: #{tpu_custom_call.1} parent=1 // pred_region
      %56 = dma.done [#allocation3], 4608
    $region21: #{tpu_custom_call.1} parent=1 // pred_fallthru
      _
    // Predicated region
    $region22: #{tpu_custom_call.1} parent=1 // pred_check
      _
    $region23: #{tpu_custom_call.1} parent=1 // pred_check_branch
      %58 = sbr.rel (0) target = $region25
    $region24: #{tpu_custom_call.1} parent=1 // pred_region
      %60 = dma.done [#allocation6], 4096
    $region25: #{tpu_custom_call.1} parent=1 // pred_fallthru
      _
    // Predicated region
    $region26: #{tpu_custom_call.1} parent=1 // pred_check
      _
    $region27: #{tpu_custom_call.1} parent=1 // pred_check_branch
      %62 = sbr.rel (0) target = $region29
    $region28: #{tpu_custom_call.1} parent=1 // pred_region
      %64 = dma.done [#allocation6], 2048
    $region29: #{tpu_custom_call.1} parent=1 // pred_fallthru
      _
    %v66 = vld [vmem:[#allocation5] sm:$0xff]
    %v67 = vld [vmem:[#allocation5 + $0x8] sm:$0xff]
    %v68 = vld [vmem:[#allocation5 + $0x10] sm:$0xff]
    %v69 = vld [vmem:[#allocation5 + $0x18] sm:$0xff]
    %v70 = vld [vmem:[#allocation5 + $0x20] sm:$0xff]
    %v71 = vld [vmem:[#allocation5 + $0x28] sm:$0xff]
    %v72 = vld [vmem:[#allocation5 + $0x30] sm:$0xff]
    %v73 = vld [vmem:[#allocation5 + $0x38] sm:$0xff]
    %v74 = vld [vmem:[#allocation5 + $0x40] sm:$0xff]
    %v75 = vld [vmem:[#allocation5 + $0x48] sm:$0xff]
    %v76 = vld [vmem:[#allocation5 + $0x50] sm:$0xff]
    %v77 = vld [vmem:[#allocation5 + $0x58] sm:$0xff]
    %v78 = vld [vmem:[#allocation5 + $0x60] sm:$0xff]
    %v79 = vld [vmem:[#allocation5 + $0x68] sm:$0xff]
    %v80 = vld [vmem:[#allocation5 + $0x70] sm:$0xff]
    %v81 = vld [vmem:[#allocation5 + $0x78] sm:$0xff]
    %v82 = vld [vmem:[#allocation5 + $0x80] sm:$0xff]
    %v83 = vld [vmem:[#allocation5 + $0x88] sm:$0xff]
    %v84 = vld [vmem:[#allocation5 + $0x90] sm:$0xff]
    %v85 = vld [vmem:[#allocation5 + $0x98] sm:$0xff]
    %v86 = vld [vmem:[#allocation5 + $0xa0] sm:$0xff]
    %v87 = vld [vmem:[#allocation5 + $0xa8] sm:$0xff]
    %v88 = vld [vmem:[#allocation5 + $0xb0] sm:$0xff]
    %v89 = vld [vmem:[#allocation5 + $0xb8] sm:$0xff]
    %v90 = vld [vmem:[#allocation5 + $0xc0] sm:$0xff]
    %v91 = vld [vmem:[#allocation5 + $0xc8] sm:$0xff]
    %v92 = vld [vmem:[#allocation5 + $0xd0] sm:$0xff]
    %v93 = vld [vmem:[#allocation5 + $0xd8] sm:$0xff]
    %v94 = vld [vmem:[#allocation5 + $0xe0] sm:$0xff]
    %v95 = vld [vmem:[#allocation5 + $0xe8] sm:$0xff]
    %v96 = vld [vmem:[#allocation5 + $0xf0] sm:$0xff]
    %v97 = vld [vmem:[#allocation5 + $0xf8] sm:$0xff]
    %v98 = vld [vmem:[#allocation2] sm:$0xff]
    %v99 = vld [vmem:[#allocation2 + $0x8] sm:$0xff]
    %v100 = vld [vmem:[#allocation2 + $0x10] sm:$0xff]
    %v101 = vld [vmem:[#allocation2 + $0x18] sm:$0xff]
    %v134 = vunpack.c.l.b16 %v66
    %v135 = vunpack.c.h.b16 %v66
    %v136 = vunpack.c.l.b16 %v67
    %v137 = vunpack.c.h.b16 %v67
    %v138 = vunpack.c.l.b16 %v68
    %v139 = vunpack.c.h.b16 %v68
    %v140 = vunpack.c.l.b16 %v69
    %v141 = vunpack.c.h.b16 %v69
    %v142 = vunpack.c.l.b16 %v70
    %v143 = vunpack.c.h.b16 %v70
    %v144 = vunpack.c.l.b16 %v71
    %v145 = vunpack.c.h.b16 %v71
    %v146 = vunpack.c.l.b16 %v72
    %v147 = vunpack.c.h.b16 %v72
    %v148 = vunpack.c.l.b16 %v73
    %v149 = vunpack.c.h.b16 %v73
    %v150 = vunpack.c.l.b16 %v74
    %v151 = vunpack.c.h.b16 %v74
    %v152 = vunpack.c.l.b16 %v75
    %v153 = vunpack.c.h.b16 %v75
    %v154 = vunpack.c.l.b16 %v76
    %v155 = vunpack.c.h.b16 %v76
    %v156 = vunpack.c.l.b16 %v77
    %v157 = vunpack.c.h.b16 %v77
    %v158 = vunpack.c.l.b16 %v78
    %v159 = vunpack.c.h.b16 %v78
    %v160 = vunpack.c.l.b16 %v79
    %v161 = vunpack.c.h.b16 %v79
    %v162 = vunpack.c.l.b16 %v80
    %v163 = vunpack.c.h.b16 %v80
    %v164 = vunpack.c.l.b16 %v81
    %v165 = vunpack.c.h.b16 %v81
    %v166 = vunpack.c.l.b16 %v82
    %v167 = vunpack.c.h.b16 %v82
    %v168 = vunpack.c.l.b16 %v83
    %v169 = vunpack.c.h.b16 %v83
    %v170 = vunpack.c.l.b16 %v84
    %v171 = vunpack.c.h.b16 %v84
    %v172 = vunpack.c.l.b16 %v85
    %v173 = vunpack.c.h.b16 %v85
    %v174 = vunpack.c.l.b16 %v86
    %v175 = vunpack.c.h.b16 %v86
    %v176 = vunpack.c.l.b16 %v87
    %v177 = vunpack.c.h.b16 %v87
    %v178 = vunpack.c.l.b16 %v88
    %v179 = vunpack.c.h.b16 %v88
    %v180 = vunpack.c.l.b16 %v89
    %v181 = vunpack.c.h.b16 %v89
    %v182 = vunpack.c.l.b16 %v90
    %v183 = vunpack.c.h.b16 %v90
    %v184 = vunpack.c.l.b16 %v91
    %v185 = vunpack.c.h.b16 %v91
    %v186 = vunpack.c.l.b16 %v92
    %v187 = vunpack.c.h.b16 %v92
    %v188 = vunpack.c.l.b16 %v93
    %v189 = vunpack.c.h.b16 %v93
    %v190 = vunpack.c.l.b16 %v94
    %v191 = vunpack.c.h.b16 %v94
    %v192 = vunpack.c.l.b16 %v95
    %v193 = vunpack.c.h.b16 %v95
    %v194 = vunpack.c.l.b16 %v96
    %v195 = vunpack.c.h.b16 %v96
    %v196 = vunpack.c.l.b16 %v97
    %v197 = vunpack.c.h.b16 %v97
    %v198 = vpack.c.b16 %v138, %v134
    %v199 = vpack.c.b16 %v139, %v135
    %v200 = vpack.c.b16 %v140, %v136
    %v201 = vpack.c.b16 %v141, %v137
    %v202 = vpack.c.b16 %v146, %v142
    %v203 = vpack.c.b16 %v147, %v143
    %v204 = vpack.c.b16 %v148, %v144
    %v205 = vpack.c.b16 %v149, %v145
    %v206 = vpack.c.b16 %v154, %v150
    %v207 = vpack.c.b16 %v155, %v151
    %v208 = vpack.c.b16 %v156, %v152
    %v209 = vpack.c.b16 %v157, %v153
    %v210 = vpack.c.b16 %v162, %v158
    %v211 = vpack.c.b16 %v163, %v159
    %v212 = vpack.c.b16 %v164, %v160
    %v213 = vpack.c.b16 %v165, %v161
    %v214 = vpack.c.b16 %v170, %v166
    %v215 = vpack.c.b16 %v171, %v167
    %v216 = vpack.c.b16 %v172, %v168
    %v217 = vpack.c.b16 %v173, %v169
    %v218 = vpack.c.b16 %v178, %v174
    %v219 = vpack.c.b16 %v179, %v175
    %v220 = vpack.c.b16 %v180, %v176
    %v221 = vpack.c.b16 %v181, %v177
    %v222 = vpack.c.b16 %v186, %v182
    %v223 = vpack.c.b16 %v187, %v183
    %v224 = vpack.c.b16 %v188, %v184
    %v225 = vpack.c.b16 %v189, %v185
    %v226 = vpack.c.b16 %v194, %v190
    %v227 = vpack.c.b16 %v195, %v191
    %v228 = vpack.c.b16 %v196, %v192
    %v229 = vpack.c.b16 %v197, %v193
    %262 = vmatpush.bf16.msra.mxu0 %v226
    %263 = vmatpush.bf16.msra.mxu0 %v222
    %264 = vmatpush.bf16.msra.mxu0 %v218
    %265 = vmatpush.bf16.msra.mxu0 %v214
    %266 = vmatpush.bf16.msra.mxu0 %v210
    %267 = vmatpush.bf16.msra.mxu0 %v206
    %268 = vmatpush.bf16.msra.mxu0 %v202
    %269 = vmatpush.bf16.msra.mxu0 %v198
    %270 = vmatmul.bf16.gmra.mxu0 0
    %v271 = vpop.f32.mrf.mxu0
    %v272 = vadd.f32 %v98, %v271
    %v273 = vpop.f32.mrf.mxu0
    %274 = vdwg.mxu0
    %275 = vmatpush.bf16.msra.mxu0 %v227
    %276 = vmatpush.bf16.msra.mxu0 %v223
    %277 = vmatpush.bf16.msra.mxu0 %v219
    %278 = vmatpush.bf16.msra.mxu0 %v215
    %279 = vmatpush.bf16.msra.mxu0 %v211
    %280 = vmatpush.bf16.msra.mxu0 %v207
    %281 = vmatpush.bf16.msra.mxu0 %v203
    %282 = vmatpush.bf16.msra.mxu0 %v199
    %283 = vmatmul.bf16.gmra.mxu0 0
    %v284 = vpop.f32.mrf.mxu0
    %v285 = vadd.f32 %v99, %v284
    %v286 = vpop.f32.mrf.mxu0
    %287 = vdwg.mxu0
    %288 = vmatpush.bf16.msra.mxu0 %v228
    %289 = vmatpush.bf16.msra.mxu0 %v224
    %290 = vmatpush.bf16.msra.mxu0 %v220
    %291 = vmatpush.bf16.msra.mxu0 %v216
    %292 = vmatpush.bf16.msra.mxu0 %v212
    %293 = vmatpush.bf16.msra.mxu0 %v208
    %294 = vmatpush.bf16.msra.mxu0 %v204
    %295 = vmatpush.bf16.msra.mxu0 %v200
    %296 = vmatmul.bf16.gmra.mxu0 0
    %v297 = vpop.f32.mrf.mxu0
    %v298 = vadd.f32 %v100, %v297
    %v299 = vpop.f32.mrf.mxu0
    %300 = vdwg.mxu0
    %301 = vmatpush.bf16.msra.mxu0 %v229
    %302 = vmatpush.bf16.msra.mxu0 %v225
    %303 = vmatpush.bf16.msra.mxu0 %v221
    %304 = vmatpush.bf16.msra.mxu0 %v217
    %305 = vmatpush.bf16.msra.mxu0 %v213
    %306 = vmatpush.bf16.msra.mxu0 %v209
    %307 = vmatpush.bf16.msra.mxu0 %v205
    %308 = vmatpush.bf16.msra.mxu0 %v201
    %309 = vmatmul.bf16.gmra.mxu0 0
    %v310 = vpop.f32.mrf.mxu0
    %v311 = vadd.f32 %v101, %v310
    %v312 = vpop.f32.mrf.mxu0
    %313 = vdwg.mxu0
    %v314 = vmul.f32 %v272, 0.5
    %v315 = vtanh.pop %v314
    %v316 = vmul.f32 %v315, 0.5
    %v317 = vadd.f32 %v316, 0.5
    %v318 = vmul.f32 %v285, 0.5
    %v319 = vtanh.pop %v318
    %v320 = vmul.f32 %v319, 0.5
    %v321 = vadd.f32 %v320, 0.5
    %v322 = vtanh.pop %v298
    %v323 = vmul.f32 %v311, 0.5
    %v324 = vtanh.pop %v323
    %v325 = vmul.f32 %v324, 0.5
    %v326 = vadd.f32 %v325, 0.5
    %v327 = vmul.f32 %v321, 0.0
    %v328 = vmul.f32 %v317, %v322
    %v329 = vadd.f32 %v327, %v328
    %v330 = vtanh.pop %v329
    %v331 = vmul.f32 %v326, %v330
    %v332 = vpack.c.bf16 %v331, %v331
    %s333 = scalar_lea.vmem [#allocation2], 32
    %v334 = vld [vmem:[%s333] sm:$0xff]
    %v335 = vld [vmem:[%s333 + $0x8] sm:$0xff]
    %v336 = vld [vmem:[%s333 + $0x10] sm:$0xff]
    %v337 = vld [vmem:[%s333 + $0x18] sm:$0xff]
    %338 = vmatpush.bf16.msra.mxu0 %v226
    %339 = vmatpush.bf16.msra.mxu0 %v222
    %340 = vmatpush.bf16.msra.mxu0 %v218
    %341 = vmatpush.bf16.msra.mxu0 %v214
    %342 = vmatpush.bf16.msra.mxu0 %v210
    %343 = vmatpush.bf16.msra.mxu0 %v206
    %344 = vmatpush.bf16.msra.mxu0 %v202
    %345 = vmatpush.bf16.msra.mxu0 %v198
    %346 = vmatmul.bf16.gmra.mxu0 %v332
    %v347 = vpop.f32.mrf.mxu0
    %v348 = vadd.f32 %v334, %v347
    %v349 = vpop.f32.mrf.mxu0
    %350 = vdwg.mxu0
    %351 = vmatpush.bf16.msra.mxu0 %v227
    %352 = vmatpush.bf16.msra.mxu0 %v223
    %353 = vmatpush.bf16.msra.mxu0 %v219
    %354 = vmatpush.bf16.msra.mxu0 %v215
    %355 = vmatpush.bf16.msra.mxu0 %v211
    %356 = vmatpush.bf16.msra.mxu0 %v207
    %357 = vmatpush.bf16.msra.mxu0 %v203
    %358 = vmatpush.bf16.msra.mxu0 %v199
    %359 = vmatmul.bf16.gmra.mxu0 %v332
    %v360 = vpop.f32.mrf.mxu0
    %v361 = vadd.f32 %v335, %v360
    %v362 = vpop.f32.mrf.mxu0
    %363 = vdwg.mxu0
    %364 = vmatpush.bf16.msra.mxu0 %v228
    %365 = vmatpush.bf16.msra.mxu0 %v224
    %366 = vmatpush.bf16.msra.mxu0 %v220
    %367 = vmatpush.bf16.msra.mxu0 %v216
    %368 = vmatpush.bf16.msra.mxu0 %v212
    %369 = vmatpush.bf16.msra.mxu0 %v208
    %370 = vmatpush.bf16.msra.mxu0 %v204
    %371 = vmatpush.bf16.msra.mxu0 %v200
    %372 = vmatmul.bf16.gmra.mxu0 %v332
    %v373 = vpop.f32.mrf.mxu0
    %v374 = vadd.f32 %v336, %v373
    %v375 = vpop.f32.mrf.mxu0
    %376 = vdwg.mxu0
    %377 = vmatpush.bf16.msra.mxu0 %v229
    %378 = vmatpush.bf16.msra.mxu0 %v225
    %379 = vmatpush.bf16.msra.mxu0 %v221
    %380 = vmatpush.bf16.msra.mxu0 %v217
    %381 = vmatpush.bf16.msra.mxu0 %v213
    %382 = vmatpush.bf16.msra.mxu0 %v209
    %383 = vmatpush.bf16.msra.mxu0 %v205
    %384 = vmatpush.bf16.msra.mxu0 %v201
    %385 = vmatmul.bf16.gmra.mxu0 %v332
    %v386 = vpop.f32.mrf.mxu0
    %v387 = vadd.f32 %v337, %v386
    %v388 = vpop.f32.mrf.mxu0
    %389 = vdwg.mxu0
    %v390 = vmul.f32 %v348, 0.5
    %v391 = vtanh.pop %v390
    %v392 = vmul.f32 %v391, 0.5
    %v393 = vadd.f32 %v392, 0.5
    %v394 = vmul.f32 %v361, 0.5
    %v395 = vtanh.pop %v394
    %v396 = vmul.f32 %v395, 0.5
    %v397 = vadd.f32 %v396, 0.5
    %v398 = vtanh.pop %v374
    %v399 = vmul.f32 %v387, 0.5
    %v400 = vtanh.pop %v399
    %v401 = vmul.f32 %v400, 0.5
    %v402 = vadd.f32 %v401, 0.5
    %v403 = vmul.f32 %v397, %v329
    %v404 = vmul.f32 %v393, %v398
    %v405 = vadd.f32 %v403, %v404
    %v406 = vtanh.pop %v405
    %v407 = vmul.f32 %v402, %v406
    %v408 = vpack.c.bf16 %v407, %v407
    %s409 = scalar_lea.vmem [#allocation2], 64
    %v410 = vld [vmem:[%s409] sm:$0xff]
    %v411 = vld [vmem:[%s409 + $0x8] sm:$0xff]
    %v412 = vld [vmem:[%s409 + $0x10] sm:$0xff]
    %v413 = vld [vmem:[%s409 + $0x18] sm:$0xff]
    %414 = vmatpush.bf16.msra.mxu0 %v226
    %415 = vmatpush.bf16.msra.mxu0 %v222
    %416 = vmatpush.bf16.msra.mxu0 %v218
    %417 = vmatpush.bf16.msra.mxu0 %v214
    %418 = vmatpush.bf16.msra.mxu0 %v210
    %419 = vmatpush.bf16.msra.mxu0 %v206
    %420 = vmatpush.bf16.msra.mxu0 %v202
    %421 = vmatpush.bf16.msra.mxu0 %v198
    %422 = vmatmul.bf16.gmra.mxu0 %v408
    %v423 = vpop.f32.mrf.mxu0
    %v424 = vadd.f32 %v410, %v423
    %v425 = vpop.f32.mrf.mxu0
    %426 = vdwg.mxu0
    %427 = vmatpush.bf16.msra.mxu0 %v227
    %428 = vmatpush.bf16.msra.mxu0 %v223
    %429 = vmatpush.bf16.msra.mxu0 %v219
    %430 = vmatpush.bf16.msra.mxu0 %v215
    %431 = vmatpush.bf16.msra.mxu0 %v211
    %432 = vmatpush.bf16.msra.mxu0 %v207
    %433 = vmatpush.bf16.msra.mxu0 %v203
    %434 = vmatpush.bf16.msra.mxu0 %v199
    %435 = vmatmul.bf16.gmra.mxu0 %v408
    %v436 = vpop.f32.mrf.mxu0
    %v437 = vadd.f32 %v411, %v436
    %v438 = vpop.f32.mrf.mxu0
    %439 = vdwg.mxu0
    %440 = vmatpush.bf16.msra.mxu0 %v228
    %441 = vmatpush.bf16.msra.mxu0 %v224
    %442 = vmatpush.bf16.msra.mxu0 %v220
    %443 = vmatpush.bf16.msra.mxu0 %v216
    %444 = vmatpush.bf16.msra.mxu0 %v212
    %445 = vmatpush.bf16.msra.mxu0 %v208
    %446 = vmatpush.bf16.msra.mxu0 %v204
    %447 = vmatpush.bf16.msra.mxu0 %v200
    %448 = vmatmul.bf16.gmra.mxu0 %v408
    %v449 = vpop.f32.mrf.mxu0
    %v450 = vadd.f32 %v412, %v449
    %v451 = vpop.f32.mrf.mxu0
    %452 = vdwg.mxu0
    %453 = vmatpush.bf16.msra.mxu0 %v229
    %454 = vmatpush.bf16.msra.mxu0 %v225
    %455 = vmatpush.bf16.msra.mxu0 %v221
    %456 = vmatpush.bf16.msra.mxu0 %v217
    %457 = vmatpush.bf16.msra.mxu0 %v213
    %458 = vmatpush.bf16.msra.mxu0 %v209
    %459 = vmatpush.bf16.msra.mxu0 %v205
    %460 = vmatpush.bf16.msra.mxu0 %v201
    %461 = vmatmul.bf16.gmra.mxu0 %v408
    %v462 = vpop.f32.mrf.mxu0
    %v463 = vadd.f32 %v413, %v462
    %v464 = vpop.f32.mrf.mxu0
    %465 = vdwg.mxu0
    %v466 = vmul.f32 %v424, 0.5
    %v467 = vtanh.pop %v466
    %v468 = vmul.f32 %v467, 0.5
    %v469 = vadd.f32 %v468, 0.5
    %v470 = vmul.f32 %v437, 0.5
    %v471 = vtanh.pop %v470
    %v472 = vmul.f32 %v471, 0.5
    %v473 = vadd.f32 %v472, 0.5
    %v474 = vtanh.pop %v450
    %v475 = vmul.f32 %v463, 0.5
    %v476 = vtanh.pop %v475
    %v477 = vmul.f32 %v476, 0.5
    %v478 = vadd.f32 %v477, 0.5
    %v479 = vmul.f32 %v473, %v405
    %v480 = vmul.f32 %v469, %v474
    %v481 = vadd.f32 %v479, %v480
    %v482 = vtanh.pop %v481
    %v483 = vmul.f32 %v478, %v482
    %v484 = vpack.c.bf16 %v483, %v483
    %s485 = scalar_lea.vmem [#allocation2], 96
    %v486 = vld [vmem:[%s485] sm:$0xff]
    %v487 = vld [vmem:[%s485 + $0x8] sm:$0xff]
    %v488 = vld [vmem:[%s485 + $0x10] sm:$0xff]
    %v489 = vld [vmem:[%s485 + $0x18] sm:$0xff]
    %490 = vmatpush.bf16.msra.mxu0 %v226
    %491 = vmatpush.bf16.msra.mxu0 %v222
    %492 = vmatpush.bf16.msra.mxu0 %v218
    %493 = vmatpush.bf16.msra.mxu0 %v214
    %494 = vmatpush.bf16.msra.mxu0 %v210
    %495 = vmatpush.bf16.msra.mxu0 %v206
    %496 = vmatpush.bf16.msra.mxu0 %v202
    %497 = vmatpush.bf16.msra.mxu0 %v198
    %498 = vmatmul.bf16.gmra.mxu0 %v484
    %v499 = vpop.f32.mrf.mxu0
    %v500 = vadd.f32 %v486, %v499
    %v501 = vpop.f32.mrf.mxu0
    %502 = vdwg.mxu0
    %503 = vmatpush.bf16.msra.mxu0 %v227
    %504 = vmatpush.bf16.msra.mxu0 %v223
    %505 = vmatpush.bf16.msra.mxu0 %v219
    %506 = vmatpush.bf16.msra.mxu0 %v215
    %507 = vmatpush.bf16.msra.mxu0 %v211
    %508 = vmatpush.bf16.msra.mxu0 %v207
    %509 = vmatpush.bf16.msra.mxu0 %v203
    %510 = vmatpush.bf16.msra.mxu0 %v199
    %511 = vmatmul.bf16.gmra.mxu0 %v484
    %v512 = vpop.f32.mrf.mxu0
    %v513 = vadd.f32 %v487, %v512
    %v514 = vpop.f32.mrf.mxu0
    %515 = vdwg.mxu0
    %516 = vmatpush.bf16.msra.mxu0 %v228
    %517 = vmatpush.bf16.msra.mxu0 %v224
    %518 = vmatpush.bf16.msra.mxu0 %v220
    %519 = vmatpush.bf16.msra.mxu0 %v216
    %520 = vmatpush.bf16.msra.mxu0 %v212
    %521 = vmatpush.bf16.msra.mxu0 %v208
    %522 = vmatpush.bf16.msra.mxu0 %v204
    %523 = vmatpush.bf16.msra.mxu0 %v200
    %524 = vmatmul.bf16.gmra.mxu0 %v484
    %v525 = vpop.f32.mrf.mxu0
    %v526 = vadd.f32 %v488, %v525
    %v527 = vpop.f32.mrf.mxu0
    %528 = vdwg.mxu0
    %529 = vmatpush.bf16.msra.mxu0 %v229
    %530 = vmatpush.bf16.msra.mxu0 %v225
    %531 = vmatpush.bf16.msra.mxu0 %v221
    %532 = vmatpush.bf16.msra.mxu0 %v217
    %533 = vmatpush.bf16.msra.mxu0 %v213
    %534 = vmatpush.bf16.msra.mxu0 %v209
    %535 = vmatpush.bf16.msra.mxu0 %v205
    %536 = vmatpush.bf16.msra.mxu0 %v201
    %537 = vmatmul.bf16.gmra.mxu0 %v484
    %v538 = vpop.f32.mrf.mxu0
    %v539 = vadd.f32 %v489, %v538
    %v540 = vpop.f32.mrf.mxu0
    %541 = vdwg.mxu0
    %v542 = vmul.f32 %v500, 0.5
    %v543 = vtanh.pop %v542
    %v544 = vmul.f32 %v543, 0.5
    %v545 = vadd.f32 %v544, 0.5
    %v546 = vmul.f32 %v513, 0.5
    %v547 = vtanh.pop %v546
    %v548 = vmul.f32 %v547, 0.5
    %v549 = vadd.f32 %v548, 0.5
    %v550 = vtanh.pop %v526
    %v551 = vmul.f32 %v539, 0.5
    %v552 = vtanh.pop %v551
    %v553 = vmul.f32 %v552, 0.5
    %v554 = vadd.f32 %v553, 0.5
    %v555 = vmul.f32 %v549, %v481
    %v556 = vmul.f32 %v545, %v550
    %v557 = vadd.f32 %v555, %v556
    %v558 = vtanh.pop %v557
    %v559 = vmul.f32 %v554, %v558
    %v560 = vpack.c.bf16 %v559, %v559
    %s561 = scalar_lea.vmem [#allocation2], 128
    %v562 = vld [vmem:[%s561] sm:$0xff]
    %v563 = vld [vmem:[%s561 + $0x8] sm:$0xff]
    %v564 = vld [vmem:[%s561 + $0x10] sm:$0xff]
    %v565 = vld [vmem:[%s561 + $0x18] sm:$0xff]
    %566 = vmatpush.bf16.msra.mxu0 %v226
    %567 = vmatpush.bf16.msra.mxu0 %v222
    %568 = vmatpush.bf16.msra.mxu0 %v218
    %569 = vmatpush.bf16.msra.mxu0 %v214
    %570 = vmatpush.bf16.msra.mxu0 %v210
    %571 = vmatpush.bf16.msra.mxu0 %v206
    %572 = vmatpush.bf16.msra.mxu0 %v202
    %573 = vmatpush.bf16.msra.mxu0 %v198
    %574 = vmatmul.bf16.gmra.mxu0 %v560
    %v575 = vpop.f32.mrf.mxu0
    %v576 = vadd.f32 %v562, %v575
    %v577 = vpop.f32.mrf.mxu0
    %578 = vdwg.mxu0
    %579 = vmatpush.bf16.msra.mxu0 %v227
    %580 = vmatpush.bf16.msra.mxu0 %v223
    %581 = vmatpush.bf16.msra.mxu0 %v219
    %582 = vmatpush.bf16.msra.mxu0 %v215
    %583 = vmatpush.bf16.msra.mxu0 %v211
    %584 = vmatpush.bf16.msra.mxu0 %v207
    %585 = vmatpush.bf16.msra.mxu0 %v203
    %586 = vmatpush.bf16.msra.mxu0 %v199
    %587 = vmatmul.bf16.gmra.mxu0 %v560
    %v588 = vpop.f32.mrf.mxu0
    %v589 = vadd.f32 %v563, %v588
    %v590 = vpop.f32.mrf.mxu0
    %591 = vdwg.mxu0
    %592 = vmatpush.bf16.msra.mxu0 %v228
    %593 = vmatpush.bf16.msra.mxu0 %v224
    %594 = vmatpush.bf16.msra.mxu0 %v220
    %595 = vmatpush.bf16.msra.mxu0 %v216
    %596 = vmatpush.bf16.msra.mxu0 %v212
    %597 = vmatpush.bf16.msra.mxu0 %v208
    %598 = vmatpush.bf16.msra.mxu0 %v204
    %599 = vmatpush.bf16.msra.mxu0 %v200
    %600 = vmatmul.bf16.gmra.mxu0 %v560
    %v601 = vpop.f32.mrf.mxu0
    %v602 = vadd.f32 %v564, %v601
    %v603 = vpop.f32.mrf.mxu0
    %604 = vdwg.mxu0
    %605 = vmatpush.bf16.msra.mxu0 %v229
    %606 = vmatpush.bf16.msra.mxu0 %v225
    %607 = vmatpush.bf16.msra.mxu0 %v221
    %608 = vmatpush.bf16.msra.mxu0 %v217
    %609 = vmatpush.bf16.msra.mxu0 %v213
    %610 = vmatpush.bf16.msra.mxu0 %v209
    %611 = vmatpush.bf16.msra.mxu0 %v205
    %612 = vmatpush.bf16.msra.mxu0 %v201
    %613 = vmatmul.bf16.gmra.mxu0 %v560
    %v614 = vpop.f32.mrf.mxu0
    %v615 = vadd.f32 %v565, %v614
    %v616 = vpop.f32.mrf.mxu0
    %617 = vdwg.mxu0
    %v618 = vmul.f32 %v576, 0.5
    %v619 = vtanh.pop %v618
    %v620 = vmul.f32 %v619, 0.5
    %v621 = vadd.f32 %v620, 0.5
    %v622 = vmul.f32 %v589, 0.5
    %v623 = vtanh.pop %v622
    %v624 = vmul.f32 %v623, 0.5
    %v625 = vadd.f32 %v624, 0.5
    %v626 = vtanh.pop %v602
    %v627 = vmul.f32 %v615, 0.5
    %v628 = vtanh.pop %v627
    %v629 = vmul.f32 %v628, 0.5
    %v630 = vadd.f32 %v629, 0.5
    %v631 = vmul.f32 %v625, %v557
    %v632 = vmul.f32 %v621, %v626
    %v633 = vadd.f32 %v631, %v632
    %v634 = vtanh.pop %v633
    %v635 = vmul.f32 %v630, %v634
    %v636 = vpack.c.bf16 %v635, %v635
    %s637 = scalar_lea.vmem [#allocation2], 160
    %v638 = vld [vmem:[%s637] sm:$0xff]
    %v639 = vld [vmem:[%s637 + $0x8] sm:$0xff]
    %v640 = vld [vmem:[%s637 + $0x10] sm:$0xff]
    %v641 = vld [vmem:[%s637 + $0x18] sm:$0xff]
    %642 = vmatpush.bf16.msra.mxu0 %v226
    %643 = vmatpush.bf16.msra.mxu0 %v222
    %644 = vmatpush.bf16.msra.mxu0 %v218
    %645 = vmatpush.bf16.msra.mxu0 %v214
    %646 = vmatpush.bf16.msra.mxu0 %v210
    %647 = vmatpush.bf16.msra.mxu0 %v206
    %648 = vmatpush.bf16.msra.mxu0 %v202
    %649 = vmatpush.bf16.msra.mxu0 %v198
    %650 = vmatmul.bf16.gmra.mxu0 %v636
    %v651 = vpop.f32.mrf.mxu0
    %v652 = vadd.f32 %v638, %v651
    %v653 = vpop.f32.mrf.mxu0
    %654 = vdwg.mxu0
    %655 = vmatpush.bf16.msra.mxu0 %v227
    %656 = vmatpush.bf16.msra.mxu0 %v223
    %657 = vmatpush.bf16.msra.mxu0 %v219
    %658 = vmatpush.bf16.msra.mxu0 %v215
    %659 = vmatpush.bf16.msra.mxu0 %v211
    %660 = vmatpush.bf16.msra.mxu0 %v207
    %661 = vmatpush.bf16.msra.mxu0 %v203
    %662 = vmatpush.bf16.msra.mxu0 %v199
    %663 = vmatmul.bf16.gmra.mxu0 %v636
    %v664 = vpop.f32.mrf.mxu0
    %v665 = vadd.f32 %v639, %v664
    %v666 = vpop.f32.mrf.mxu0
    %667 = vdwg.mxu0
    %668 = vmatpush.bf16.msra.mxu0 %v228
    %669 = vmatpush.bf16.msra.mxu0 %v224
    %670 = vmatpush.bf16.msra.mxu0 %v220
    %671 = vmatpush.bf16.msra.mxu0 %v216
    %672 = vmatpush.bf16.msra.mxu0 %v212
    %673 = vmatpush.bf16.msra.mxu0 %v208
    %674 = vmatpush.bf16.msra.mxu0 %v204
    %675 = vmatpush.bf16.msra.mxu0 %v200
    %676 = vmatmul.bf16.gmra.mxu0 %v636
    %v677 = vpop.f32.mrf.mxu0
    %v678 = vadd.f32 %v640, %v677
    %v679 = vpop.f32.mrf.mxu0
    %680 = vdwg.mxu0
    %681 = vmatpush.bf16.msra.mxu0 %v229
    %682 = vmatpush.bf16.msra.mxu0 %v225
    %683 = vmatpush.bf16.msra.mxu0 %v221
    %684 = vmatpush.bf16.msra.mxu0 %v217
    %685 = vmatpush.bf16.msra.mxu0 %v213
    %686 = vmatpush.bf16.msra.mxu0 %v209
    %687 = vmatpush.bf16.msra.mxu0 %v205
    %688 = vmatpush.bf16.msra.mxu0 %v201
    %689 = vmatmul.bf16.gmra.mxu0 %v636
    %v690 = vpop.f32.mrf.mxu0
    %v691 = vadd.f32 %v641, %v690
    %v692 = vpop.f32.mrf.mxu0
    %693 = vdwg.mxu0
    %v694 = vmul.f32 %v652, 0.5
    %v695 = vtanh.pop %v694
    %v696 = vmul.f32 %v695, 0.5
    %v697 = vadd.f32 %v696, 0.5
    %v698 = vmul.f32 %v665, 0.5
    %v699 = vtanh.pop %v698
    %v700 = vmul.f32 %v699, 0.5
    %v701 = vadd.f32 %v700, 0.5
    %v702 = vtanh.pop %v678
    %v703 = vmul.f32 %v691, 0.5
    %v704 = vtanh.pop %v703
    %v705 = vmul.f32 %v704, 0.5
    %v706 = vadd.f32 %v705, 0.5
    %v707 = vmul.f32 %v701, %v633
    %v708 = vmul.f32 %v697, %v702
    %v709 = vadd.f32 %v707, %v708
    %v710 = vtanh.pop %v709
    %v711 = vmul.f32 %v706, %v710
    %v712 = vpack.c.bf16 %v711, %v711
    %s713 = scalar_lea.vmem [#allocation2], 192
    %v714 = vld [vmem:[%s713] sm:$0xff]
    %v715 = vld [vmem:[%s713 + $0x8] sm:$0xff]
    %v716 = vld [vmem:[%s713 + $0x10] sm:$0xff]
    %v717 = vld [vmem:[%s713 + $0x18] sm:$0xff]
    %718 = vmatpush.bf16.msra.mxu0 %v226
    %719 = vmatpush.bf16.msra.mxu0 %v222
    %720 = vmatpush.bf16.msra.mxu0 %v218
    %721 = vmatpush.bf16.msra.mxu0 %v214
    %722 = vmatpush.bf16.msra.mxu0 %v210
    %723 = vmatpush.bf16.msra.mxu0 %v206
    %724 = vmatpush.bf16.msra.mxu0 %v202
    %725 = vmatpush.bf16.msra.mxu0 %v198
    %726 = vmatmul.bf16.gmra.mxu0 %v712
    %v727 = vpop.f32.mrf.mxu0
    %v728 = vadd.f32 %v714, %v727
    %v729 = vpop.f32.mrf.mxu0
    %730 = vdwg.mxu0
    %731 = vmatpush.bf16.msra.mxu0 %v227
    %732 = vmatpush.bf16.msra.mxu0 %v223
    %733 = vmatpush.bf16.msra.mxu0 %v219
    %734 = vmatpush.bf16.msra.mxu0 %v215
    %735 = vmatpush.bf16.msra.mxu0 %v211
    %736 = vmatpush.bf16.msra.mxu0 %v207
    %737 = vmatpush.bf16.msra.mxu0 %v203
    %738 = vmatpush.bf16.msra.mxu0 %v199
    %739 = vmatmul.bf16.gmra.mxu0 %v712
    %v740 = vpop.f32.mrf.mxu0
    %v741 = vadd.f32 %v715, %v740
    %v742 = vpop.f32.mrf.mxu0
    %743 = vdwg.mxu0
    %744 = vmatpush.bf16.msra.mxu0 %v228
    %745 = vmatpush.bf16.msra.mxu0 %v224
    %746 = vmatpush.bf16.msra.mxu0 %v220
    %747 = vmatpush.bf16.msra.mxu0 %v216
    %748 = vmatpush.bf16.msra.mxu0 %v212
    %749 = vmatpush.bf16.msra.mxu0 %v208
    %750 = vmatpush.bf16.msra.mxu0 %v204
    %751 = vmatpush.bf16.msra.mxu0 %v200
    %752 = vmatmul.bf16.gmra.mxu0 %v712
    %v753 = vpop.f32.mrf.mxu0
    %v754 = vadd.f32 %v716, %v753
    %v755 = vpop.f32.mrf.mxu0
    %756 = vdwg.mxu0
    %757 = vmatpush.bf16.msra.mxu0 %v229
    %758 = vmatpush.bf16.msra.mxu0 %v225
    %759 = vmatpush.bf16.msra.mxu0 %v221
    %760 = vmatpush.bf16.msra.mxu0 %v217
    %761 = vmatpush.bf16.msra.mxu0 %v213
    %762 = vmatpush.bf16.msra.mxu0 %v209
    %763 = vmatpush.bf16.msra.mxu0 %v205
    %764 = vmatpush.bf16.msra.mxu0 %v201
    %765 = vmatmul.bf16.gmra.mxu0 %v712
    %v766 = vpop.f32.mrf.mxu0
    %v767 = vadd.f32 %v717, %v766
    %v768 = vpop.f32.mrf.mxu0
    %769 = vdwg.mxu0
    %v770 = vmul.f32 %v728, 0.5
    %v771 = vtanh.pop %v770
    %v772 = vmul.f32 %v771, 0.5
    %v773 = vadd.f32 %v772, 0.5
    %v774 = vmul.f32 %v741, 0.5
    %v775 = vtanh.pop %v774
    %v776 = vmul.f32 %v775, 0.5
    %v777 = vadd.f32 %v776, 0.5
    %v778 = vtanh.pop %v754
    %v779 = vmul.f32 %v767, 0.5
    %v780 = vtanh.pop %v779
    %v781 = vmul.f32 %v780, 0.5
    %v782 = vadd.f32 %v781, 0.5
    %v783 = vmul.f32 %v777, %v709
    %v784 = vmul.f32 %v773, %v778
    %v785 = vadd.f32 %v783, %v784
    %v786 = vtanh.pop %v785
    %v787 = vmul.f32 %v782, %v786
    %v788 = vpack.c.bf16 %v787, %v787
    %s789 = scalar_lea.vmem [#allocation2], 224
    %v790 = vld [vmem:[%s789] sm:$0xff]
    %v791 = vld [vmem:[%s789 + $0x8] sm:$0xff]
    %v792 = vld [vmem:[%s789 + $0x10] sm:$0xff]
    %v793 = vld [vmem:[%s789 + $0x18] sm:$0xff]
    %794 = vmatpush.bf16.msra.mxu0 %v226
    %795 = vmatpush.bf16.msra.mxu0 %v222
    %796 = vmatpush.bf16.msra.mxu0 %v218
    %797 = vmatpush.bf16.msra.mxu0 %v214
    %798 = vmatpush.bf16.msra.mxu0 %v210
    %799 = vmatpush.bf16.msra.mxu0 %v206
    %800 = vmatpush.bf16.msra.mxu0 %v202
    %801 = vmatpush.bf16.msra.mxu0 %v198
    %802 = vmatmul.bf16.gmra.mxu0 %v788
    %v803 = vpop.f32.mrf.mxu0
    %v804 = vadd.f32 %v790, %v803
    %v805 = vpop.f32.mrf.mxu0
    %806 = vdwg.mxu0
    %807 = vmatpush.bf16.msra.mxu0 %v227
    %808 = vmatpush.bf16.msra.mxu0 %v223
    %809 = vmatpush.bf16.msra.mxu0 %v219
    %810 = vmatpush.bf16.msra.mxu0 %v215
    %811 = vmatpush.bf16.msra.mxu0 %v211
    %812 = vmatpush.bf16.msra.mxu0 %v207
    %813 = vmatpush.bf16.msra.mxu0 %v203
    %814 = vmatpush.bf16.msra.mxu0 %v199
    %815 = vmatmul.bf16.gmra.mxu0 %v788
    %v816 = vpop.f32.mrf.mxu0
    %v817 = vadd.f32 %v791, %v816
    %v818 = vpop.f32.mrf.mxu0
    %819 = vdwg.mxu0
    %820 = vmatpush.bf16.msra.mxu0 %v228
    %821 = vmatpush.bf16.msra.mxu0 %v224
    %822 = vmatpush.bf16.msra.mxu0 %v220
    %823 = vmatpush.bf16.msra.mxu0 %v216
    %824 = vmatpush.bf16.msra.mxu0 %v212
    %825 = vmatpush.bf16.msra.mxu0 %v208
    %826 = vmatpush.bf16.msra.mxu0 %v204
    %827 = vmatpush.bf16.msra.mxu0 %v200
    %828 = vmatmul.bf16.gmra.mxu0 %v788
    %v829 = vpop.f32.mrf.mxu0
    %v830 = vadd.f32 %v792, %v829
    %v831 = vpop.f32.mrf.mxu0
    %832 = vdwg.mxu0
    %833 = vmatpush.bf16.msra.mxu0 %v229
    %834 = vmatpush.bf16.msra.mxu0 %v225
    %835 = vmatpush.bf16.msra.mxu0 %v221
    %836 = vmatpush.bf16.msra.mxu0 %v217
    %837 = vmatpush.bf16.msra.mxu0 %v213
    %838 = vmatpush.bf16.msra.mxu0 %v209
    %839 = vmatpush.bf16.msra.mxu0 %v205
    %840 = vmatpush.bf16.msra.mxu0 %v201
    %841 = vmatmul.bf16.gmra.mxu0 %v788
    %v842 = vpop.f32.mrf.mxu0
    %v843 = vadd.f32 %v793, %v842
    %v844 = vpop.f32.mrf.mxu0
    %845 = vdwg.mxu0
    %v846 = vmul.f32 %v804, 0.5
    %v847 = vtanh.pop %v846
    %v848 = vmul.f32 %v847, 0.5
    %v849 = vadd.f32 %v848, 0.5
    %v850 = vmul.f32 %v817, 0.5
    %v851 = vtanh.pop %v850
    %v852 = vmul.f32 %v851, 0.5
    %v853 = vadd.f32 %v852, 0.5
    %v854 = vtanh.pop %v830
    %v855 = vmul.f32 %v843, 0.5
    %v856 = vtanh.pop %v855
    %v857 = vmul.f32 %v856, 0.5
    %v858 = vadd.f32 %v857, 0.5
    %v859 = vmul.f32 %v853, %v785
    %v860 = vmul.f32 %v849, %v854
    %v861 = vadd.f32 %v859, %v860
    %v862 = vtanh.pop %v861
    %v863 = vmul.f32 %v858, %v862
    %v864 = vpack.c.bf16 %v863, %v863
    %s865 = scalar_lea.vmem [#allocation2], 256
    %v866 = vld [vmem:[%s865] sm:$0xff]
    %v867 = vld [vmem:[%s865 + $0x8] sm:$0xff]
    %v868 = vld [vmem:[%s865 + $0x10] sm:$0xff]
    %v869 = vld [vmem:[%s865 + $0x18] sm:$0xff]
    %870 = vmatpush.bf16.msra.mxu0 %v226
    %871 = vmatpush.bf16.msra.mxu0 %v222
    %872 = vmatpush.bf16.msra.mxu0 %v218
    %873 = vmatpush.bf16.msra.mxu0 %v214
    %874 = vmatpush.bf16.msra.mxu0 %v210
    %875 = vmatpush.bf16.msra.mxu0 %v206
    %876 = vmatpush.bf16.msra.mxu0 %v202
    %877 = vmatpush.bf16.msra.mxu0 %v198
    %878 = vmatmul.bf16.gmra.mxu0 %v864
    %v879 = vpop.f32.mrf.mxu0
    %v880 = vadd.f32 %v866, %v879
    %v881 = vpop.f32.mrf.mxu0
    %882 = vdwg.mxu0
    %883 = vmatpush.bf16.msra.mxu0 %v227
    %884 = vmatpush.bf16.msra.mxu0 %v223
    %885 = vmatpush.bf16.msra.mxu0 %v219
    %886 = vmatpush.bf16.msra.mxu0 %v215
    %887 = vmatpush.bf16.msra.mxu0 %v211
    %888 = vmatpush.bf16.msra.mxu0 %v207
    %889 = vmatpush.bf16.msra.mxu0 %v203
    %890 = vmatpush.bf16.msra.mxu0 %v199
    %891 = vmatmul.bf16.gmra.mxu0 %v864
    %v892 = vpop.f32.mrf.mxu0
    %v893 = vadd.f32 %v867, %v892
    %v894 = vpop.f32.mrf.mxu0
    %895 = vdwg.mxu0
    %896 = vmatpush.bf16.msra.mxu0 %v228
    %897 = vmatpush.bf16.msra.mxu0 %v224
    %898 = vmatpush.bf16.msra.mxu0 %v220
    %899 = vmatpush.bf16.msra.mxu0 %v216
    %900 = vmatpush.bf16.msra.mxu0 %v212
    %901 = vmatpush.bf16.msra.mxu0 %v208
    %902 = vmatpush.bf16.msra.mxu0 %v204
    %903 = vmatpush.bf16.msra.mxu0 %v200
    %904 = vmatmul.bf16.gmra.mxu0 %v864
    %v905 = vpop.f32.mrf.mxu0
    %v906 = vadd.f32 %v868, %v905
    %v907 = vpop.f32.mrf.mxu0
    %908 = vdwg.mxu0
    %909 = vmatpush.bf16.msra.mxu0 %v229
    %910 = vmatpush.bf16.msra.mxu0 %v225
    %911 = vmatpush.bf16.msra.mxu0 %v221
    %912 = vmatpush.bf16.msra.mxu0 %v217
    %913 = vmatpush.bf16.msra.mxu0 %v213
    %914 = vmatpush.bf16.msra.mxu0 %v209
    %915 = vmatpush.bf16.msra.mxu0 %v205
    %916 = vmatpush.bf16.msra.mxu0 %v201
    %917 = vmatmul.bf16.gmra.mxu0 %v864
    %v918 = vpop.f32.mrf.mxu0
    %v919 = vadd.f32 %v869, %v918
    %v920 = vpop.f32.mrf.mxu0
    %921 = vdwg.mxu0
    %v922 = vmul.f32 %v880, 0.5
    %v923 = vtanh.pop %v922
    %v924 = vmul.f32 %v923, 0.5
    %v925 = vadd.f32 %v924, 0.5
    %v926 = vmul.f32 %v893, 0.5
    %v927 = vtanh.pop %v926
    %v928 = vmul.f32 %v927, 0.5
    %v929 = vadd.f32 %v928, 0.5
    %v930 = vtanh.pop %v906
    %v931 = vmul.f32 %v919, 0.5
    %v932 = vtanh.pop %v931
    %v933 = vmul.f32 %v932, 0.5
    %v934 = vadd.f32 %v933, 0.5
    %v935 = vmul.f32 %v929, %v861
    %v936 = vmul.f32 %v925, %v930
    %v937 = vadd.f32 %v935, %v936
    %v938 = vtanh.pop %v937
    %v939 = vmul.f32 %v934, %v938
    %v940 = vld [vmem:[#allocation7] sm:$0xff]
    %v941 = vld [vmem:[#allocation7 + $0x8] sm:$0xff]
    %v942 = vld [vmem:[#allocation7 + $0x10] sm:$0xff]
    %v943 = vld [vmem:[#allocation7 + $0x18] sm:$0xff]
    %v944 = vld [vmem:[#allocation7 + $0x20] sm:$0xff]
    %v945 = vld [vmem:[#allocation7 + $0x28] sm:$0xff]
    %v946 = vld [vmem:[#allocation7 + $0x30] sm:$0xff]
    %v947 = vld [vmem:[#allocation7 + $0x38] sm:$0xff]
    %v948 = vld [vmem:[#allocation7 + $0x40] sm:$0xff]
    %v949 = vld [vmem:[#allocation7 + $0x48] sm:$0xff]
    %v950 = vld [vmem:[#allocation7 + $0x50] sm:$0xff]
    %v951 = vld [vmem:[#allocation7 + $0x58] sm:$0xff]
    %v952 = vld [vmem:[#allocation7 + $0x60] sm:$0xff]
    %v953 = vld [vmem:[#allocation7 + $0x68] sm:$0xff]
    %v954 = vld [vmem:[#allocation7 + $0x70] sm:$0xff]
    %v955 = vld [vmem:[#allocation7 + $0x78] sm:$0xff]
    %v956 = vld [vmem:[%s3] sm:$0x1]
    %v958 = vperm.slane %v956, 0
    %960 = vmatpush.msra.mxu0 %v955
    %961 = vmatpush.msra.mxu0 %v954
    %962 = vmatpush.msra.mxu0 %v953
    %963 = vmatpush.msra.mxu0 %v952
    %964 = vmatpush.msra.mxu0 %v951
    %965 = vmatpush.msra.mxu0 %v950
    %966 = vmatpush.msra.mxu0 %v949
    %967 = vmatpush.msra.mxu0 %v948
    %968 = vmatpush.msra.mxu0 %v947
    %969 = vmatpush.msra.mxu0 %v946
    %970 = vmatpush.msra.mxu0 %v945
    %971 = vmatpush.msra.mxu0 %v944
    %972 = vmatpush.msra.mxu0 %v943
    %973 = vmatpush.msra.mxu0 %v942
    %974 = vmatpush.msra.mxu0 %v941
    %975 = vmatpush.msra.mxu0 %v940
    %976 = vmatmul.f32.gmra.mxu0 %v939
    %v977 = vpop.f32.mrf.mxu0
    %v978 = vadd.f32 %v958, %v977
    %979 = vdwg.mxu0
    %980 = vst [vmem:[#allocation8] sm:$0xff] %v978
    // Predicated region
    $region30: #{tpu_custom_call.1} parent=1 // pred_check
      _
    $region31: #{tpu_custom_call.1} parent=1 // pred_check_branch
      %982 = sbr.rel (0) target = $region33
    $region32: #{tpu_custom_call.1} parent=1 // pred_region
      %984 = vsyncadd [#allocation4], 0
      %s986 = sshll.u32 [#allocation8], 4
      %s987 = int_to_ptr.vmem [resolvable:$true] %s986
      %s988 = sshll.u32 %s4, 4
      %s989 = int_to_ptr.hbm [resolvable:$true] %s988
      %991 = dma.vmem_to_hbm [thread:$0]  %s987, 128, %s989, [#allocation4]
    $region33: #{tpu_custom_call.1} parent=1 // pred_fallthru
      _
    // Predicated region
    $region34: #{tpu_custom_call.1} parent=1 // pred_check
      _
    $region35: #{tpu_custom_call.1} parent=1 // pred_check_branch
      %993 = sbr.rel (0) target = $region37
    $region36: #{tpu_custom_call.1} parent=1 // pred_region
      %995 = dma.done [#allocation4], 128
    $region37: #{tpu_custom_call.1} parent=1 // pred_fallthru
      _
    %996 = vsyncpa [#allocation3], 1
    %997 = vsyncpa [#allocation6], 1
    %998 = vsyncpa [#allocation4], 1

</llo_original>
